<compile_context>
chip_gen: v7x
topology: tpu7x:2x2x1
jax: 0.10.0
libtpu: 0.0.40
codegen_flags: <defaults>
</compile_context>

<pallas_src>
import math

import jax
import jax.numpy as jnp
from jax.experimental import pallas as pl
from jax.experimental.pallas import tpu as pltpu


# ----------------------------- static geometry --------------------------------
_H_IN, _C_IN = 36, 3
_K1, _S1, _OC1, _OH1 = 8, 4, 32, 8     # conv1
_K2, _S2, _OC2, _OH2 = 4, 2, 64, 3     # conv2
_K3, _S3, _OC3, _OH3 = 3, 1, 64, 1     # conv3

_P1 = _OH1 * _OH1              # 64  conv1 output positions per sample
_KP1 = _K1 * _K1 * _C_IN       # 192 im2col patch width for conv1
_KF = _P1 * _OC1               # 2048 contraction width of the fused conv2∘conv3 GEMM

_NB_MAX = 64                   # samples per grid block (keeps block VMEM ~7 MiB)


# ------------------------------ fused kernel ----------------------------------

def _cnn_kernel(p_ref, w1_ref, w23_ref, o_ref, h1_ref):
    """Fully VMEM-resident fused forward for one batch block.

    p_ref  : [NB*64, 192]  conv1 im2col patches, columns ordered (kh, kw, cin)
    w1_ref : [192, 32]     conv1 weight, rows ordered (kh, kw, cin)
    w23_ref: [2048, 64]    composed conv2∘conv3 weight, rows ordered (h, w, c)
    o_ref  : [NB, 64]      final output (1x1 spatial collapsed)
    h1_ref : [NB, 2048]    VMEM scratch, lane-dense conv1 activation
    """
    nb = o_ref.shape[0]

    # ---- Layer 1: one im2col GEMM (K=192), accumulation stays in the MXU. ----
    h1 = jnp.dot(p_ref[...], w1_ref[...],
                 preferred_element_type=jnp.float32)          # [NB*64, 32]

    # ---- Relayout [NB*64, 32] -> lane-dense [NB, 2048] scratch. --------------
    # Leading-dim split (64 % 8 == 0) is layout-trivial; the 64 static lane-slice
    # stores are the only relayout work and hide under the next block's DMA.
    h1 = h1.reshape(nb, _P1, _OC1)
    for s in range(_P1):
        h1_ref[:, s * _OC1:(s + 1) * _OC1] = h1[:, s, :]

    # ---- Layers 2+3: one GEMM against the pre-composed weight (K=2048). ------
    o_ref[...] = jnp.dot(h1_ref[...], w23_ref[...],
                         preferred_element_type=jnp.float32).astype(o_ref.dtype)


def _fused_cnn(patches, w1r, w23, nb):
    """patches: [n_pad*64, 192]; returns [n_pad, 64]."""
    n = patches.shape[0] // _P1
    grid = (n // nb,)
    flops = 2 * n * (_P1 * _KP1 * _OC1 + _KF * _OC3)
    bytes_accessed = 4 * (patches.size + w1r.size + w23.size + n * _OC3)
    return pl.pallas_call(
        _cnn_kernel,
        out_shape=jax.ShapeDtypeStruct((n, _OC3), jnp.float32),
        grid_spec=pltpu.PrefetchScalarGridSpec(
            num_scalar_prefetch=0,
            grid=grid,
            in_specs=[
                pl.BlockSpec((nb * _P1, _KP1), lambda i: (i, 0)),   # patches (blocked)
                pl.BlockSpec((_KP1, _OC1), lambda i: (0, 0)),       # w1  (resident)
                pl.BlockSpec((_KF, _OC3), lambda i: (0, 0)),        # w23 (resident)
            ],
            out_specs=pl.BlockSpec((nb, _OC3), lambda i: (i, 0)),
            scratch_shapes=[pltpu.VMEM((nb, _KF), jnp.float32)],
        ),
        compiler_params=pltpu.CompilerParams(
            dimension_semantics=("parallel",),
            vmem_limit_bytes=64 * 1024 * 1024,
        ),
        cost_estimate=pl.CostEstimate(
            flops=flops, transcendentals=0, bytes_accessed=bytes_accessed),
    )(patches, w1r, w23)


# --------------------------------- wrapper -------------------------------------

def _im2col_conv1(x_nhwc):
    """[N, 36, 36, 3] -> lane-dense [N*64, 192], columns ordered (kh, kw, cin)."""
    n = x_nhwc.shape[0]
    idx = (jnp.arange(_OH1) * _S1)[:, None] + jnp.arange(_K1)[None, :]   # [8, 8]
    xr = x_nhwc[:, idx, :, :]                    # [N, oh, kh, W, C]
    xrc = xr[:, :, :, idx, :]                    # [N, oh, kh, ow, kw, C]
    patches = jnp.transpose(xrc, (0, 1, 3, 2, 4, 5))   # [N, oh, ow, kh, kw, C]
    return patches.reshape(n * _P1, _KP1)


def _compose_w23(w2, w3):
    """Fold conv2 (OIHW [64,32,4,4]) and conv3 (OIHW [64,64,3,3]) -- no nonlinearity
    between them -- into one [2048, 64] weight, rows ordered (h, w, c) over the
    8x8x32 conv1 activation."""
    w23 = jnp.zeros((_OH1, _OH1, _OC1, _OC3), jnp.float32)
    for p in range(_OH2):
        for q in range(_OH2):
            blk = jnp.einsum("mikl,om->klio", w2, w3[:, :, p, q])   # [4, 4, 32, 64]
            w23 = w23.at[_S2 * p:_S2 * p + _K2, _S2 * q:_S2 * q + _K2].add(blk)
    return w23.reshape(_KF, _OC3)


def cnn_forward(params, x):
    """x: [N, 3, 36, 36] NCHW (PyTorch layout) -> [N, 64, 1, 1]."""
    n, c, h, w = x.shape
    assert (c, h, w) == (_C_IN, _H_IN, _H_IN), \
        "fused kernel is specialized to 3x36x36 inputs"
    # TODO(synk): other input resolutions (spatial output > 1x1) would keep conv2/conv3
    # as separate per-layer im2col GEMMs instead of the composed-weight fusion.

    x_nhwc = jnp.transpose(x, (0, 2, 3, 1)).astype(jnp.float32)
    patches = _im2col_conv1(x_nhwc)                                # [N*64, 192]

    w1r = jnp.transpose(params["conv1"], (2, 3, 1, 0)).reshape(_KP1, _OC1)
    w23 = _compose_w23(params["conv2"], params["conv3"])           # [2048, 64]

    nb = n if n <= _NB_MAX else _NB_MAX
    n_pad = ((n + nb - 1) // nb) * nb
    if n_pad != n:
        patches = jnp.pad(patches, ((0, (n_pad - n) * _P1), (0, 0)))

    out = _fused_cnn(patches, w1r, w23, nb)[:n]                    # [N, 64]
    return out.reshape(n, _OC3, _OH3, _OH3)                        # NCHW


# --------------------------------- the model -----------------------------------

def init_cnn_params(key):
    """Deterministic init matching nn.Conv2d default (kaiming-uniform-ish bound)."""
    def conv_w(k, oc, ic, ks):
        bound = 1.0 / math.sqrt(ic * ks * ks)
        return jax.random.uniform(
            k, (oc, ic, ks, ks), dtype=jnp.float32, minval=-bound, maxval=bound)
    k1, k2, k3 = jax.random.split(key, 3)
    return {
        "conv1": conv_w(k1, _OC1, _C_IN, _K1),   # stride 4
        "conv2": conv_w(k2, _OC2, _OC1, _K2),    # stride 2
        "conv3": conv_w(k3, _OC3, _OC2, _K3),    # stride 1
    }


def cnn_forward_ref(params, x):
    """Pure-XLA reference for correctness checking."""
    dn = ("NCHW", "OIHW", "NCHW")
    x = jax.lax.conv_general_dilated(x, params["conv1"], (4, 4), "VALID",
                                     dimension_numbers=dn)
    x = jax.lax.conv_general_dilated(x, params["conv2"], (2, 2), "VALID",
                                     dimension_numbers=dn)
    x = jax.lax.conv_general_dilated(x, params["conv3"], (1, 1), "VALID",
                                     dimension_numbers=dn)
    return x


if __name__ == "__main__":
    key = jax.random.PRNGKey(0)
    k_params, k_x = jax.random.split(key)

    params = init_cnn_params(k_params)
    # NCHW, 3 input channels: 36x36 -> conv1: 8x8 -> conv2: 3x3 -> conv3: 1x1
    x = jax.random.normal(k_x, (2, _C_IN, _H_IN, _H_IN), dtype=jnp.float32)

    out = jax.block_until_ready(jax.jit(cnn_forward)(params, x))
    assert out.shape == (2, _OC3, 1, 1), out.shape

    ref = jax.block_until_ready(cnn_forward_ref(params, x))
    err = float(jnp.max(jnp.abs(out - ref)))
    assert err < 1e-3, f"max abs error {err} vs XLA reference"

    print("KERNEL_OK")
</pallas_src>

<mosaic_0001>
module attributes {stable_mosaic.version = 11 : i64} {
  func.func @_cnn_kernel(%arg0: i32, %arg1: memref<128x192xf32, #tpu.memory_space<vmem>>, %arg2: memref<192x32xf32, #tpu.memory_space<vmem>>, %arg3: memref<2048x64xf32, #tpu.memory_space<vmem>>, %arg4: memref<2x64xf32, #tpu.memory_space<vmem>>, %arg5: memref<2x2048xf32, #tpu.memory_space<vmem>>) attributes {dimension_semantics = [#tpu.dimension_semantics<parallel>], iteration_bounds = array<i64: 1>, scalar_prefetch = 0 : i64, scratch_operands = 1 : i64, tpu.core_type = #tpu.core_type<tc>, window_params = [{transform_indices = @transform_0, window_bounds = array<i64: 128, 192>}, {pipeline_mode = #tpu.pipeline_mode<synchronous>, transform_indices = @transform_1, window_bounds = array<i64: 192, 32>}, {pipeline_mode = #tpu.pipeline_mode<synchronous>, transform_indices = @transform_2, window_bounds = array<i64: 2048, 64>}, {transform_indices = @transform_3, window_bounds = array<i64: 2, 64>}]} {
    %c0 = arith.constant 0 : index
    %c0_0 = arith.constant 0 : index
    %0 = vector.load %arg1[%c0, %c0_0] : memref<128x192xf32, #tpu.memory_space<vmem>>, vector<128x192xf32>
    %c0_1 = arith.constant 0 : index
    %c0_2 = arith.constant 0 : index
    %1 = vector.load %arg2[%c0_1, %c0_2] : memref<192x32xf32, #tpu.memory_space<vmem>>, vector<192x32xf32>
    %cst = arith.constant dense<0.000000e+00> : vector<128x32xf32>
    %2 = tpu.matmul %0, %1, %cst {dimension_numbers = #tpu.dot_dimension_numbers<[1], [0], [0], [1], [0, 0, 1, 1], [], []>} : vector<128x192xf32>, vector<192x32xf32>, vector<128x32xf32> -> vector<128x32xf32>
    %3 = vector.shape_cast %2 : vector<128x32xf32> to vector<2x64x32xf32>
    %4 = vector.extract_strided_slice %3 {offsets = [0, 0, 0], sizes = [2, 1, 32], strides = [1, 1, 1]} : vector<2x64x32xf32> to vector<2x1x32xf32>
    %5 = vector.shape_cast %4 : vector<2x1x32xf32> to vector<2x32xf32>
    %c0_3 = arith.constant 0 : index
    %c0_4 = arith.constant 0 : index
    %6 = vector.load %arg5[%c0_3, %c0_4] : memref<2x2048xf32, #tpu.memory_space<vmem>>, vector<2x32xf32>
    tpu.vector_store %arg5[%c0_3, %c0_4], %5 {strides = array<i32>} : memref<2x2048xf32, #tpu.memory_space<vmem>>, vector<2x32xf32>,
    %7 = vector.extract_strided_slice %3 {offsets = [0, 1, 0], sizes = [2, 1, 32], strides = [1, 1, 1]} : vector<2x64x32xf32> to vector<2x1x32xf32>
    %8 = vector.shape_cast %7 : vector<2x1x32xf32> to vector<2x32xf32>
    %c0_5 = arith.constant 0 : index
    %c32 = arith.constant 32 : index
    %9 = vector.load %arg5[%c0_5, %c32] : memref<2x2048xf32, #tpu.memory_space<vmem>>, vector<2x32xf32>
    tpu.vector_store %arg5[%c0_5, %c32], %8 {strides = array<i32>} : memref<2x2048xf32, #tpu.memory_space<vmem>>, vector<2x32xf32>,
    %10 = vector.extract_strided_slice %3 {offsets = [0, 2, 0], sizes = [2, 1, 32], strides = [1, 1, 1]} : vector<2x64x32xf32> to vector<2x1x32xf32>
    %11 = vector.shape_cast %10 : vector<2x1x32xf32> to vector<2x32xf32>
    %c0_6 = arith.constant 0 : index
    %c64 = arith.constant 64 : index
    %12 = vector.load %arg5[%c0_6, %c64] : memref<2x2048xf32, #tpu.memory_space<vmem>>, vector<2x32xf32>
    tpu.vector_store %arg5[%c0_6, %c64], %11 {strides = array<i32>} : memref<2x2048xf32, #tpu.memory_space<vmem>>, vector<2x32xf32>,
    %13 = vector.extract_strided_slice %3 {offsets = [0, 3, 0], sizes = [2, 1, 32], strides = [1, 1, 1]} : vector<2x64x32xf32> to vector<2x1x32xf32>
    %14 = vector.shape_cast %13 : vector<2x1x32xf32> to vector<2x32xf32>
    %c0_7 = arith.constant 0 : index
    %c96 = arith.constant 96 : index
    %15 = vector.load %arg5[%c0_7, %c96] : memref<2x2048xf32, #tpu.memory_space<vmem>>, vector<2x32xf32>
    tpu.vector_store %arg5[%c0_7, %c96], %14 {strides = array<i32>} : memref<2x2048xf32, #tpu.memory_space<vmem>>, vector<2x32xf32>,
    %16 = vector.extract_strided_slice %3 {offsets = [0, 4, 0], sizes = [2, 1, 32], strides = [1, 1, 1]} : vector<2x64x32xf32> to vector<2x1x32xf32>
    %17 = vector.shape_cast %16 : vector<2x1x32xf32> to vector<2x32xf32>
    %c0_8 = arith.constant 0 : index
    %c128 = arith.constant 128 : index
    %18 = vector.load %arg5[%c0_8, %c128] : memref<2x2048xf32, #tpu.memory_space<vmem>>, vector<2x32xf32>
    tpu.vector_store %arg5[%c0_8, %c128], %17 {strides = array<i32>} : memref<2x2048xf32, #tpu.memory_space<vmem>>, vector<2x32xf32>,
    %19 = vector.extract_strided_slice %3 {offsets = [0, 5, 0], sizes = [2, 1, 32], strides = [1, 1, 1]} : vector<2x64x32xf32> to vector<2x1x32xf32>
    %20 = vector.shape_cast %19 : vector<2x1x32xf32> to vector<2x32xf32>
    %c0_9 = arith.constant 0 : index
    %c160 = arith.constant 160 : index
    %21 = vector.load %arg5[%c0_9, %c160] : memref<2x2048xf32, #tpu.memory_space<vmem>>, vector<2x32xf32>
    tpu.vector_store %arg5[%c0_9, %c160], %20 {strides = array<i32>} : memref<2x2048xf32, #tpu.memory_space<vmem>>, vector<2x32xf32>,
    %22 = vector.extract_strided_slice %3 {offsets = [0, 6, 0], sizes = [2, 1, 32], strides = [1, 1, 1]} : vector<2x64x32xf32> to vector<2x1x32xf32>
    %23 = vector.shape_cast %22 : vector<2x1x32xf32> to vector<2x32xf32>
    %c0_10 = arith.constant 0 : index
    %c192 = arith.constant 192 : index
    %24 = vector.load %arg5[%c0_10, %c192] : memref<2x2048xf32, #tpu.memory_space<vmem>>, vector<2x32xf32>
    tpu.vector_store %arg5[%c0_10, %c192], %23 {strides = array<i32>} : memref<2x2048xf32, #tpu.memory_space<vmem>>, vector<2x32xf32>,
    %25 = vector.extract_strided_slice %3 {offsets = [0, 7, 0], sizes = [2, 1, 32], strides = [1, 1, 1]} : vector<2x64x32xf32> to vector<2x1x32xf32>
    %26 = vector.shape_cast %25 : vector<2x1x32xf32> to vector<2x32xf32>
    %c0_11 = arith.constant 0 : index
    %c224 = arith.constant 224 : index
    %27 = vector.load %arg5[%c0_11, %c224] : memref<2x2048xf32, #tpu.memory_space<vmem>>, vector<2x32xf32>
    tpu.vector_store %arg5[%c0_11, %c224], %26 {strides = array<i32>} : memref<2x2048xf32, #tpu.memory_space<vmem>>, vector<2x32xf32>,
    %28 = vector.extract_strided_slice %3 {offsets = [0, 8, 0], sizes = [2, 1, 32], strides = [1, 1, 1]} : vector<2x64x32xf32> to vector<2x1x32xf32>
    %29 = vector.shape_cast %28 : vector<2x1x32xf32> to vector<2x32xf32>
    %c0_12 = arith.constant 0 : index
    %c256 = arith.constant 256 : index
    %30 = vector.load %arg5[%c0_12, %c256] : memref<2x2048xf32, #tpu.memory_space<vmem>>, vector<2x32xf32>
    tpu.vector_store %arg5[%c0_12, %c256], %29 {strides = array<i32>} : memref<2x2048xf32, #tpu.memory_space<vmem>>, vector<2x32xf32>,
    %31 = vector.extract_strided_slice %3 {offsets = [0, 9, 0], sizes = [2, 1, 32], strides = [1, 1, 1]} : vector<2x64x32xf32> to vector<2x1x32xf32>
    %32 = vector.shape_cast %31 : vector<2x1x32xf32> to vector<2x32xf32>
    %c0_13 = arith.constant 0 : index
    %c288 = arith.constant 288 : index
    %33 = vector.load %arg5[%c0_13, %c288] : memref<2x2048xf32, #tpu.memory_space<vmem>>, vector<2x32xf32>
    tpu.vector_store %arg5[%c0_13, %c288], %32 {strides = array<i32>} : memref<2x2048xf32, #tpu.memory_space<vmem>>, vector<2x32xf32>,
    %34 = vector.extract_strided_slice %3 {offsets = [0, 10, 0], sizes = [2, 1, 32], strides = [1, 1, 1]} : vector<2x64x32xf32> to vector<2x1x32xf32>
    %35 = vector.shape_cast %34 : vector<2x1x32xf32> to vector<2x32xf32>
    %c0_14 = arith.constant 0 : index
    %c320 = arith.constant 320 : index
    %36 = vector.load %arg5[%c0_14, %c320] : memref<2x2048xf32, #tpu.memory_space<vmem>>, vector<2x32xf32>
    tpu.vector_store %arg5[%c0_14, %c320], %35 {strides = array<i32>} : memref<2x2048xf32, #tpu.memory_space<vmem>>, vector<2x32xf32>,
    %37 = vector.extract_strided_slice %3 {offsets = [0, 11, 0], sizes = [2, 1, 32], strides = [1, 1, 1]} : vector<2x64x32xf32> to vector<2x1x32xf32>
    %38 = vector.shape_cast %37 : vector<2x1x32xf32> to vector<2x32xf32>
    %c0_15 = arith.constant 0 : index
    %c352 = arith.constant 352 : index
    %39 = vector.load %arg5[%c0_15, %c352] : memref<2x2048xf32, #tpu.memory_space<vmem>>, vector<2x32xf32>
    tpu.vector_store %arg5[%c0_15, %c352], %38 {strides = array<i32>} : memref<2x2048xf32, #tpu.memory_space<vmem>>, vector<2x32xf32>,
    %40 = vector.extract_strided_slice %3 {offsets = [0, 12, 0], sizes = [2, 1, 32], strides = [1, 1, 1]} : vector<2x64x32xf32> to vector<2x1x32xf32>
    %41 = vector.shape_cast %40 : vector<2x1x32xf32> to vector<2x32xf32>
    %c0_16 = arith.constant 0 : index
    %c384 = arith.constant 384 : index
    %42 = vector.load %arg5[%c0_16, %c384] : memref<2x2048xf32, #tpu.memory_space<vmem>>, vector<2x32xf32>
    tpu.vector_store %arg5[%c0_16, %c384], %41 {strides = array<i32>} : memref<2x2048xf32, #tpu.memory_space<vmem>>, vector<2x32xf32>,
    %43 = vector.extract_strided_slice %3 {offsets = [0, 13, 0], sizes = [2, 1, 32], strides = [1, 1, 1]} : vector<2x64x32xf32> to vector<2x1x32xf32>
    %44 = vector.shape_cast %43 : vector<2x1x32xf32> to vector<2x32xf32>
    %c0_17 = arith.constant 0 : index
    %c416 = arith.constant 416 : index
    %45 = vector.load %arg5[%c0_17, %c416] : memref<2x2048xf32, #tpu.memory_space<vmem>>, vector<2x32xf32>
    tpu.vector_store %arg5[%c0_17, %c416], %44 {strides = array<i32>} : memref<2x2048xf32, #tpu.memory_space<vmem>>, vector<2x32xf32>,
    %46 = vector.extract_strided_slice %3 {offsets = [0, 14, 0], sizes = [2, 1, 32], strides = [1, 1, 1]} : vector<2x64x32xf32> to vector<2x1x32xf32>
    %47 = vector.shape_cast %46 : vector<2x1x32xf32> to vector<2x32xf32>
    %c0_18 = arith.constant 0 : index
    %c448 = arith.constant 448 : index
    %48 = vector.load %arg5[%c0_18, %c448] : memref<2x2048xf32, #tpu.memory_space<vmem>>, vector<2x32xf32>
    tpu.vector_store %arg5[%c0_18, %c448], %47 {strides = array<i32>} : memref<2x2048xf32, #tpu.memory_space<vmem>>, vector<2x32xf32>,
    %49 = vector.extract_strided_slice %3 {offsets = [0, 15, 0], sizes = [2, 1, 32], strides = [1, 1, 1]} : vector<2x64x32xf32> to vector<2x1x32xf32>
    %50 = vector.shape_cast %49 : vector<2x1x32xf32> to vector<2x32xf32>
    %c0_19 = arith.constant 0 : index
    %c480 = arith.constant 480 : index
    %51 = vector.load %arg5[%c0_19, %c480] : memref<2x2048xf32, #tpu.memory_space<vmem>>, vector<2x32xf32>
    tpu.vector_store %arg5[%c0_19, %c480], %50 {strides = array<i32>} : memref<2x2048xf32, #tpu.memory_space<vmem>>, vector<2x32xf32>,
    %52 = vector.extract_strided_slice %3 {offsets = [0, 16, 0], sizes = [2, 1, 32], strides = [1, 1, 1]} : vector<2x64x32xf32> to vector<2x1x32xf32>
    %53 = vector.shape_cast %52 : vector<2x1x32xf32> to vector<2x32xf32>
    %c0_20 = arith.constant 0 : index
    %c512 = arith.constant 512 : index
    %54 = vector.load %arg5[%c0_20, %c512] : memref<2x2048xf32, #tpu.memory_space<vmem>>, vector<2x32xf32>
    tpu.vector_store %arg5[%c0_20, %c512], %53 {strides = array<i32>} : memref<2x2048xf32, #tpu.memory_space<vmem>>, vector<2x32xf32>,
    %55 = vector.extract_strided_slice %3 {offsets = [0, 17, 0], sizes = [2, 1, 32], strides = [1, 1, 1]} : vector<2x64x32xf32> to vector<2x1x32xf32>
    %56 = vector.shape_cast %55 : vector<2x1x32xf32> to vector<2x32xf32>
    %c0_21 = arith.constant 0 : index
    %c544 = arith.constant 544 : index
    %57 = vector.load %arg5[%c0_21, %c544] : memref<2x2048xf32, #tpu.memory_space<vmem>>, vector<2x32xf32>
    tpu.vector_store %arg5[%c0_21, %c544], %56 {strides = array<i32>} : memref<2x2048xf32, #tpu.memory_space<vmem>>, vector<2x32xf32>,
    %58 = vector.extract_strided_slice %3 {offsets = [0, 18, 0], sizes = [2, 1, 32], strides = [1, 1, 1]} : vector<2x64x32xf32> to vector<2x1x32xf32>
    %59 = vector.shape_cast %58 : vector<2x1x32xf32> to vector<2x32xf32>
    %c0_22 = arith.constant 0 : index
    %c576 = arith.constant 576 : index
    %60 = vector.load %arg5[%c0_22, %c576] : memref<2x2048xf32, #tpu.memory_space<vmem>>, vector<2x32xf32>
    tpu.vector_store %arg5[%c0_22, %c576], %59 {strides = array<i32>} : memref<2x2048xf32, #tpu.memory_space<vmem>>, vector<2x32xf32>,
    %61 = vector.extract_strided_slice %3 {offsets = [0, 19, 0], sizes = [2, 1, 32], strides = [1, 1, 1]} : vector<2x64x32xf32> to vector<2x1x32xf32>
    %62 = vector.shape_cast %61 : vector<2x1x32xf32> to vector<2x32xf32>
    %c0_23 = arith.constant 0 : index
    %c608 = arith.constant 608 : index
    %63 = vector.load %arg5[%c0_23, %c608] : memref<2x2048xf32, #tpu.memory_space<vmem>>, vector<2x32xf32>
    tpu.vector_store %arg5[%c0_23, %c608], %62 {strides = array<i32>} : memref<2x2048xf32, #tpu.memory_space<vmem>>, vector<2x32xf32>,
    %64 = vector.extract_strided_slice %3 {offsets = [0, 20, 0], sizes = [2, 1, 32], strides = [1, 1, 1]} : vector<2x64x32xf32> to vector<2x1x32xf32>
    %65 = vector.shape_cast %64 : vector<2x1x32xf32> to vector<2x32xf32>
    %c0_24 = arith.constant 0 : index
    %c640 = arith.constant 640 : index
    %66 = vector.load %arg5[%c0_24, %c640] : memref<2x2048xf32, #tpu.memory_space<vmem>>, vector<2x32xf32>
    tpu.vector_store %arg5[%c0_24, %c640], %65 {strides = array<i32>} : memref<2x2048xf32, #tpu.memory_space<vmem>>, vector<2x32xf32>,
    %67 = vector.extract_strided_slice %3 {offsets = [0, 21, 0], sizes = [2, 1, 32], strides = [1, 1, 1]} : vector<2x64x32xf32> to vector<2x1x32xf32>
    %68 = vector.shape_cast %67 : vector<2x1x32xf32> to vector<2x32xf32>
    %c0_25 = arith.constant 0 : index
    %c672 = arith.constant 672 : index
    %69 = vector.load %arg5[%c0_25, %c672] : memref<2x2048xf32, #tpu.memory_space<vmem>>, vector<2x32xf32>
    tpu.vector_store %arg5[%c0_25, %c672], %68 {strides = array<i32>} : memref<2x2048xf32, #tpu.memory_space<vmem>>, vector<2x32xf32>,
    %70 = vector.extract_strided_slice %3 {offsets = [0, 22, 0], sizes = [2, 1, 32], strides = [1, 1, 1]} : vector<2x64x32xf32> to vector<2x1x32xf32>
    %71 = vector.shape_cast %70 : vector<2x1x32xf32> to vector<2x32xf32>
    %c0_26 = arith.constant 0 : index
    %c704 = arith.constant 704 : index
    %72 = vector.load %arg5[%c0_26, %c704] : memref<2x2048xf32, #tpu.memory_space<vmem>>, vector<2x32xf32>
    tpu.vector_store %arg5[%c0_26, %c704], %71 {strides = array<i32>} : memref<2x2048xf32, #tpu.memory_space<vmem>>, vector<2x32xf32>,
    %73 = vector.extract_strided_slice %3 {offsets = [0, 23, 0], sizes = [2, 1, 32], strides = [1, 1, 1]} : vector<2x64x32xf32> to vector<2x1x32xf32>
    %74 = vector.shape_cast %73 : vector<2x1x32xf32> to vector<2x32xf32>
    %c0_27 = arith.constant 0 : index
    %c736 = arith.constant 736 : index
    %75 = vector.load %arg5[%c0_27, %c736] : memref<2x2048xf32, #tpu.memory_space<vmem>>, vector<2x32xf32>
    tpu.vector_store %arg5[%c0_27, %c736], %74 {strides = array<i32>} : memref<2x2048xf32, #tpu.memory_space<vmem>>, vector<2x32xf32>,
    %76 = vector.extract_strided_slice %3 {offsets = [0, 24, 0], sizes = [2, 1, 32], strides = [1, 1, 1]} : vector<2x64x32xf32> to vector<2x1x32xf32>
    %77 = vector.shape_cast %76 : vector<2x1x32xf32> to vector<2x32xf32>
    %c0_28 = arith.constant 0 : index
    %c768 = arith.constant 768 : index
    %78 = vector.load %arg5[%c0_28, %c768] : memref<2x2048xf32, #tpu.memory_space<vmem>>, vector<2x32xf32>
    tpu.vector_store %arg5[%c0_28, %c768], %77 {strides = array<i32>} : memref<2x2048xf32, #tpu.memory_space<vmem>>, vector<2x32xf32>,
    %79 = vector.extract_strided_slice %3 {offsets = [0, 25, 0], sizes = [2, 1, 32], strides = [1, 1, 1]} : vector<2x64x32xf32> to vector<2x1x32xf32>
    %80 = vector.shape_cast %79 : vector<2x1x32xf32> to vector<2x32xf32>
    %c0_29 = arith.constant 0 : index
    %c800 = arith.constant 800 : index
    %81 = vector.load %arg5[%c0_29, %c800] : memref<2x2048xf32, #tpu.memory_space<vmem>>, vector<2x32xf32>
    tpu.vector_store %arg5[%c0_29, %c800], %80 {strides = array<i32>} : memref<2x2048xf32, #tpu.memory_space<vmem>>, vector<2x32xf32>,
    %82 = vector.extract_strided_slice %3 {offsets = [0, 26, 0], sizes = [2, 1, 32], strides = [1, 1, 1]} : vector<2x64x32xf32> to vector<2x1x32xf32>
    %83 = vector.shape_cast %82 : vector<2x1x32xf32> to vector<2x32xf32>
    %c0_30 = arith.constant 0 : index
    %c832 = arith.constant 832 : index
    %84 = vector.load %arg5[%c0_30, %c832] : memref<2x2048xf32, #tpu.memory_space<vmem>>, vector<2x32xf32>
    tpu.vector_store %arg5[%c0_30, %c832], %83 {strides = array<i32>} : memref<2x2048xf32, #tpu.memory_space<vmem>>, vector<2x32xf32>,
    %85 = vector.extract_strided_slice %3 {offsets = [0, 27, 0], sizes = [2, 1, 32], strides = [1, 1, 1]} : vector<2x64x32xf32> to vector<2x1x32xf32>
    %86 = vector.shape_cast %85 : vector<2x1x32xf32> to vector<2x32xf32>
    %c0_31 = arith.constant 0 : index
    %c864 = arith.constant 864 : index
    %87 = vector.load %arg5[%c0_31, %c864] : memref<2x2048xf32, #tpu.memory_space<vmem>>, vector<2x32xf32>
    tpu.vector_store %arg5[%c0_31, %c864], %86 {strides = array<i32>} : memref<2x2048xf32, #tpu.memory_space<vmem>>, vector<2x32xf32>,
    %88 = vector.extract_strided_slice %3 {offsets = [0, 28, 0], sizes = [2, 1, 32], strides = [1, 1, 1]} : vector<2x64x32xf32> to vector<2x1x32xf32>
    %89 = vector.shape_cast %88 : vector<2x1x32xf32> to vector<2x32xf32>
    %c0_32 = arith.constant 0 : index
    %c896 = arith.constant 896 : index
    %90 = vector.load %arg5[%c0_32, %c896] : memref<2x2048xf32, #tpu.memory_space<vmem>>, vector<2x32xf32>
    tpu.vector_store %arg5[%c0_32, %c896], %89 {strides = array<i32>} : memref<2x2048xf32, #tpu.memory_space<vmem>>, vector<2x32xf32>,
    %91 = vector.extract_strided_slice %3 {offsets = [0, 29, 0], sizes = [2, 1, 32], strides = [1, 1, 1]} : vector<2x64x32xf32> to vector<2x1x32xf32>
    %92 = vector.shape_cast %91 : vector<2x1x32xf32> to vector<2x32xf32>
    %c0_33 = arith.constant 0 : index
    %c928 = arith.constant 928 : index
    %93 = vector.load %arg5[%c0_33, %c928] : memref<2x2048xf32, #tpu.memory_space<vmem>>, vector<2x32xf32>
    tpu.vector_store %arg5[%c0_33, %c928], %92 {strides = array<i32>} : memref<2x2048xf32, #tpu.memory_space<vmem>>, vector<2x32xf32>,
    %94 = vector.extract_strided_slice %3 {offsets = [0, 30, 0], sizes = [2, 1, 32], strides = [1, 1, 1]} : vector<2x64x32xf32> to vector<2x1x32xf32>
    %95 = vector.shape_cast %94 : vector<2x1x32xf32> to vector<2x32xf32>
    %c0_34 = arith.constant 0 : index
    %c960 = arith.constant 960 : index
    %96 = vector.load %arg5[%c0_34, %c960] : memref<2x2048xf32, #tpu.memory_space<vmem>>, vector<2x32xf32>
    tpu.vector_store %arg5[%c0_34, %c960], %95 {strides = array<i32>} : memref<2x2048xf32, #tpu.memory_space<vmem>>, vector<2x32xf32>,
    %97 = vector.extract_strided_slice %3 {offsets = [0, 31, 0], sizes = [2, 1, 32], strides = [1, 1, 1]} : vector<2x64x32xf32> to vector<2x1x32xf32>
    %98 = vector.shape_cast %97 : vector<2x1x32xf32> to vector<2x32xf32>
    %c0_35 = arith.constant 0 : index
    %c992 = arith.constant 992 : index
    %99 = vector.load %arg5[%c0_35, %c992] : memref<2x2048xf32, #tpu.memory_space<vmem>>, vector<2x32xf32>
    tpu.vector_store %arg5[%c0_35, %c992], %98 {strides = array<i32>} : memref<2x2048xf32, #tpu.memory_space<vmem>>, vector<2x32xf32>,
    %100 = vector.extract_strided_slice %3 {offsets = [0, 32, 0], sizes = [2, 1, 32], strides = [1, 1, 1]} : vector<2x64x32xf32> to vector<2x1x32xf32>
    %101 = vector.shape_cast %100 : vector<2x1x32xf32> to vector<2x32xf32>
    %c0_36 = arith.constant 0 : index
    %c1024 = arith.constant 1024 : index
    %102 = vector.load %arg5[%c0_36, %c1024] : memref<2x2048xf32, #tpu.memory_space<vmem>>, vector<2x32xf32>
    tpu.vector_store %arg5[%c0_36, %c1024], %101 {strides = array<i32>} : memref<2x2048xf32, #tpu.memory_space<vmem>>, vector<2x32xf32>,
    %103 = vector.extract_strided_slice %3 {offsets = [0, 33, 0], sizes = [2, 1, 32], strides = [1, 1, 1]} : vector<2x64x32xf32> to vector<2x1x32xf32>
    %104 = vector.shape_cast %103 : vector<2x1x32xf32> to vector<2x32xf32>
    %c0_37 = arith.constant 0 : index
    %c1056 = arith.constant 1056 : index
    %105 = vector.load %arg5[%c0_37, %c1056] : memref<2x2048xf32, #tpu.memory_space<vmem>>, vector<2x32xf32>
    tpu.vector_store %arg5[%c0_37, %c1056], %104 {strides = array<i32>} : memref<2x2048xf32, #tpu.memory_space<vmem>>, vector<2x32xf32>,
    %106 = vector.extract_strided_slice %3 {offsets = [0, 34, 0], sizes = [2, 1, 32], strides = [1, 1, 1]} : vector<2x64x32xf32> to vector<2x1x32xf32>
    %107 = vector.shape_cast %106 : vector<2x1x32xf32> to vector<2x32xf32>
    %c0_38 = arith.constant 0 : index
    %c1088 = arith.constant 1088 : index
    %108 = vector.load %arg5[%c0_38, %c1088] : memref<2x2048xf32, #tpu.memory_space<vmem>>, vector<2x32xf32>
    tpu.vector_store %arg5[%c0_38, %c1088], %107 {strides = array<i32>} : memref<2x2048xf32, #tpu.memory_space<vmem>>, vector<2x32xf32>,
    %109 = vector.extract_strided_slice %3 {offsets = [0, 35, 0], sizes = [2, 1, 32], strides = [1, 1, 1]} : vector<2x64x32xf32> to vector<2x1x32xf32>
    %110 = vector.shape_cast %109 : vector<2x1x32xf32> to vector<2x32xf32>
    %c0_39 = arith.constant 0 : index
    %c1120 = arith.constant 1120 : index
    %111 = vector.load %arg5[%c0_39, %c1120] : memref<2x2048xf32, #tpu.memory_space<vmem>>, vector<2x32xf32>
    tpu.vector_store %arg5[%c0_39, %c1120], %110 {strides = array<i32>} : memref<2x2048xf32, #tpu.memory_space<vmem>>, vector<2x32xf32>,
    %112 = vector.extract_strided_slice %3 {offsets = [0, 36, 0], sizes = [2, 1, 32], strides = [1, 1, 1]} : vector<2x64x32xf32> to vector<2x1x32xf32>
    %113 = vector.shape_cast %112 : vector<2x1x32xf32> to vector<2x32xf32>
    %c0_40 = arith.constant 0 : index
    %c1152 = arith.constant 1152 : index
    %114 = vector.load %arg5[%c0_40, %c1152] : memref<2x2048xf32, #tpu.memory_space<vmem>>, vector<2x32xf32>
    tpu.vector_store %arg5[%c0_40, %c1152], %113 {strides = array<i32>} : memref<2x2048xf32, #tpu.memory_space<vmem>>, vector<2x32xf32>,
    %115 = vector.extract_strided_slice %3 {offsets = [0, 37, 0], sizes = [2, 1, 32], strides = [1, 1, 1]} : vector<2x64x32xf32> to vector<2x1x32xf32>
    %116 = vector.shape_cast %115 : vector<2x1x32xf32> to vector<2x32xf32>
    %c0_41 = arith.constant 0 : index
    %c1184 = arith.constant 1184 : index
    %117 = vector.load %arg5[%c0_41, %c1184] : memref<2x2048xf32, #tpu.memory_space<vmem>>, vector<2x32xf32>
    tpu.vector_store %arg5[%c0_41, %c1184], %116 {strides = array<i32>} : memref<2x2048xf32, #tpu.memory_space<vmem>>, vector<2x32xf32>,
    %118 = vector.extract_strided_slice %3 {offsets = [0, 38, 0], sizes = [2, 1, 32], strides = [1, 1, 1]} : vector<2x64x32xf32> to vector<2x1x32xf32>
    %119 = vector.shape_cast %118 : vector<2x1x32xf32> to vector<2x32xf32>
    %c0_42 = arith.constant 0 : index
    %c1216 = arith.constant 1216 : index
    %120 = vector.load %arg5[%c0_42, %c1216] : memref<2x2048xf32, #tpu.memory_space<vmem>>, vector<2x32xf32>
    tpu.vector_store %arg5[%c0_42, %c1216], %119 {strides = array<i32>} : memref<2x2048xf32, #tpu.memory_space<vmem>>, vector<2x32xf32>,
    %121 = vector.extract_strided_slice %3 {offsets = [0, 39, 0], sizes = [2, 1, 32], strides = [1, 1, 1]} : vector<2x64x32xf32> to vector<2x1x32xf32>
    %122 = vector.shape_cast %121 : vector<2x1x32xf32> to vector<2x32xf32>
    %c0_43 = arith.constant 0 : index
    %c1248 = arith.constant 1248 : index
    %123 = vector.load %arg5[%c0_43, %c1248] : memref<2x2048xf32, #tpu.memory_space<vmem>>, vector<2x32xf32>
    tpu.vector_store %arg5[%c0_43, %c1248], %122 {strides = array<i32>} : memref<2x2048xf32, #tpu.memory_space<vmem>>, vector<2x32xf32>,
    %124 = vector.extract_strided_slice %3 {offsets = [0, 40, 0], sizes = [2, 1, 32], strides = [1, 1, 1]} : vector<2x64x32xf32> to vector<2x1x32xf32>
    %125 = vector.shape_cast %124 : vector<2x1x32xf32> to vector<2x32xf32>
    %c0_44 = arith.constant 0 : index
    %c1280 = arith.constant 1280 : index
    %126 = vector.load %arg5[%c0_44, %c1280] : memref<2x2048xf32, #tpu.memory_space<vmem>>, vector<2x32xf32>
    tpu.vector_store %arg5[%c0_44, %c1280], %125 {strides = array<i32>} : memref<2x2048xf32, #tpu.memory_space<vmem>>, vector<2x32xf32>,
    %127 = vector.extract_strided_slice %3 {offsets = [0, 41, 0], sizes = [2, 1, 32], strides = [1, 1, 1]} : vector<2x64x32xf32> to vector<2x1x32xf32>
    %128 = vector.shape_cast %127 : vector<2x1x32xf32> to vector<2x32xf32>
    %c0_45 = arith.constant 0 : index
    %c1312 = arith.constant 1312 : index
    %129 = vector.load %arg5[%c0_45, %c1312] : memref<2x2048xf32, #tpu.memory_space<vmem>>, vector<2x32xf32>
    tpu.vector_store %arg5[%c0_45, %c1312], %128 {strides = array<i32>} : memref<2x2048xf32, #tpu.memory_space<vmem>>, vector<2x32xf32>,
    %130 = vector.extract_strided_slice %3 {offsets = [0, 42, 0], sizes = [2, 1, 32], strides = [1, 1, 1]} : vector<2x64x32xf32> to vector<2x1x32xf32>
    %131 = vector.shape_cast %130 : vector<2x1x32xf32> to vector<2x32xf32>
    %c0_46 = arith.constant 0 : index
    %c1344 = arith.constant 1344 : index
    %132 = vector.load %arg5[%c0_46, %c1344] : memref<2x2048xf32, #tpu.memory_space<vmem>>, vector<2x32xf32>
    tpu.vector_store %arg5[%c0_46, %c1344], %131 {strides = array<i32>} : memref<2x2048xf32, #tpu.memory_space<vmem>>, vector<2x32xf32>,
    %133 = vector.extract_strided_slice %3 {offsets = [0, 43, 0], sizes = [2, 1, 32], strides = [1, 1, 1]} : vector<2x64x32xf32> to vector<2x1x32xf32>
    %134 = vector.shape_cast %133 : vector<2x1x32xf32> to vector<2x32xf32>
    %c0_47 = arith.constant 0 : index
    %c1376 = arith.constant 1376 : index
    %135 = vector.load %arg5[%c0_47, %c1376] : memref<2x2048xf32, #tpu.memory_space<vmem>>, vector<2x32xf32>
    tpu.vector_store %arg5[%c0_47, %c1376], %134 {strides = array<i32>} : memref<2x2048xf32, #tpu.memory_space<vmem>>, vector<2x32xf32>,
    %136 = vector.extract_strided_slice %3 {offsets = [0, 44, 0], sizes = [2, 1, 32], strides = [1, 1, 1]} : vector<2x64x32xf32> to vector<2x1x32xf32>
    %137 = vector.shape_cast %136 : vector<2x1x32xf32> to vector<2x32xf32>
    %c0_48 = arith.constant 0 : index
    %c1408 = arith.constant 1408 : index
    %138 = vector.load %arg5[%c0_48, %c1408] : memref<2x2048xf32, #tpu.memory_space<vmem>>, vector<2x32xf32>
    tpu.vector_store %arg5[%c0_48, %c1408], %137 {strides = array<i32>} : memref<2x2048xf32, #tpu.memory_space<vmem>>, vector<2x32xf32>,
    %139 = vector.extract_strided_slice %3 {offsets = [0, 45, 0], sizes = [2, 1, 32], strides = [1, 1, 1]} : vector<2x64x32xf32> to vector<2x1x32xf32>
    %140 = vector.shape_cast %139 : vector<2x1x32xf32> to vector<2x32xf32>
    %c0_49 = arith.constant 0 : index
    %c1440 = arith.constant 1440 : index
    %141 = vector.load %arg5[%c0_49, %c1440] : memref<2x2048xf32, #tpu.memory_space<vmem>>, vector<2x32xf32>
    tpu.vector_store %arg5[%c0_49, %c1440], %140 {strides = array<i32>} : memref<2x2048xf32, #tpu.memory_space<vmem>>, vector<2x32xf32>,
    %142 = vector.extract_strided_slice %3 {offsets = [0, 46, 0], sizes = [2, 1, 32], strides = [1, 1, 1]} : vector<2x64x32xf32> to vector<2x1x32xf32>
    %143 = vector.shape_cast %142 : vector<2x1x32xf32> to vector<2x32xf32>
    %c0_50 = arith.constant 0 : index
    %c1472 = arith.constant 1472 : index
    %144 = vector.load %arg5[%c0_50, %c1472] : memref<2x2048xf32, #tpu.memory_space<vmem>>, vector<2x32xf32>
    tpu.vector_store %arg5[%c0_50, %c1472], %143 {strides = array<i32>} : memref<2x2048xf32, #tpu.memory_space<vmem>>, vector<2x32xf32>,
    %145 = vector.extract_strided_slice %3 {offsets = [0, 47, 0], sizes = [2, 1, 32], strides = [1, 1, 1]} : vector<2x64x32xf32> to vector<2x1x32xf32>
    %146 = vector.shape_cast %145 : vector<2x1x32xf32> to vector<2x32xf32>
    %c0_51 = arith.constant 0 : index
    %c1504 = arith.constant 1504 : index
    %147 = vector.load %arg5[%c0_51, %c1504] : memref<2x2048xf32, #tpu.memory_space<vmem>>, vector<2x32xf32>
    tpu.vector_store %arg5[%c0_51, %c1504], %146 {strides = array<i32>} : memref<2x2048xf32, #tpu.memory_space<vmem>>, vector<2x32xf32>,
    %148 = vector.extract_strided_slice %3 {offsets = [0, 48, 0], sizes = [2, 1, 32], strides = [1, 1, 1]} : vector<2x64x32xf32> to vector<2x1x32xf32>
    %149 = vector.shape_cast %148 : vector<2x1x32xf32> to vector<2x32xf32>
    %c0_52 = arith.constant 0 : index
    %c1536 = arith.constant 1536 : index
    %150 = vector.load %arg5[%c0_52, %c1536] : memref<2x2048xf32, #tpu.memory_space<vmem>>, vector<2x32xf32>
    tpu.vector_store %arg5[%c0_52, %c1536], %149 {strides = array<i32>} : memref<2x2048xf32, #tpu.memory_space<vmem>>, vector<2x32xf32>,
    %151 = vector.extract_strided_slice %3 {offsets = [0, 49, 0], sizes = [2, 1, 32], strides = [1, 1, 1]} : vector<2x64x32xf32> to vector<2x1x32xf32>
    %152 = vector.shape_cast %151 : vector<2x1x32xf32> to vector<2x32xf32>
    %c0_53 = arith.constant 0 : index
    %c1568 = arith.constant 1568 : index
    %153 = vector.load %arg5[%c0_53, %c1568] : memref<2x2048xf32, #tpu.memory_space<vmem>>, vector<2x32xf32>
    tpu.vector_store %arg5[%c0_53, %c1568], %152 {strides = array<i32>} : memref<2x2048xf32, #tpu.memory_space<vmem>>, vector<2x32xf32>,
    %154 = vector.extract_strided_slice %3 {offsets = [0, 50, 0], sizes = [2, 1, 32], strides = [1, 1, 1]} : vector<2x64x32xf32> to vector<2x1x32xf32>
    %155 = vector.shape_cast %154 : vector<2x1x32xf32> to vector<2x32xf32>
    %c0_54 = arith.constant 0 : index
    %c1600 = arith.constant 1600 : index
    %156 = vector.load %arg5[%c0_54, %c1600] : memref<2x2048xf32, #tpu.memory_space<vmem>>, vector<2x32xf32>
    tpu.vector_store %arg5[%c0_54, %c1600], %155 {strides = array<i32>} : memref<2x2048xf32, #tpu.memory_space<vmem>>, vector<2x32xf32>,
    %157 = vector.extract_strided_slice %3 {offsets = [0, 51, 0], sizes = [2, 1, 32], strides = [1, 1, 1]} : vector<2x64x32xf32> to vector<2x1x32xf32>
    %158 = vector.shape_cast %157 : vector<2x1x32xf32> to vector<2x32xf32>
    %c0_55 = arith.constant 0 : index
    %c1632 = arith.constant 1632 : index
    %159 = vector.load %arg5[%c0_55, %c1632] : memref<2x2048xf32, #tpu.memory_space<vmem>>, vector<2x32xf32>
    tpu.vector_store %arg5[%c0_55, %c1632], %158 {strides = array<i32>} : memref<2x2048xf32, #tpu.memory_space<vmem>>, vector<2x32xf32>,
    %160 = vector.extract_strided_slice %3 {offsets = [0, 52, 0], sizes = [2, 1, 32], strides = [1, 1, 1]} : vector<2x64x32xf32> to vector<2x1x32xf32>
    %161 = vector.shape_cast %160 : vector<2x1x32xf32> to vector<2x32xf32>
    %c0_56 = arith.constant 0 : index
    %c1664 = arith.constant 1664 : index
    %162 = vector.load %arg5[%c0_56, %c1664] : memref<2x2048xf32, #tpu.memory_space<vmem>>, vector<2x32xf32>
    tpu.vector_store %arg5[%c0_56, %c1664], %161 {strides = array<i32>} : memref<2x2048xf32, #tpu.memory_space<vmem>>, vector<2x32xf32>,
    %163 = vector.extract_strided_slice %3 {offsets = [0, 53, 0], sizes = [2, 1, 32], strides = [1, 1, 1]} : vector<2x64x32xf32> to vector<2x1x32xf32>
    %164 = vector.shape_cast %163 : vector<2x1x32xf32> to vector<2x32xf32>
    %c0_57 = arith.constant 0 : index
    %c1696 = arith.constant 1696 : index
    %165 = vector.load %arg5[%c0_57, %c1696] : memref<2x2048xf32, #tpu.memory_space<vmem>>, vector<2x32xf32>
    tpu.vector_store %arg5[%c0_57, %c1696], %164 {strides = array<i32>} : memref<2x2048xf32, #tpu.memory_space<vmem>>, vector<2x32xf32>,
    %166 = vector.extract_strided_slice %3 {offsets = [0, 54, 0], sizes = [2, 1, 32], strides = [1, 1, 1]} : vector<2x64x32xf32> to vector<2x1x32xf32>
    %167 = vector.shape_cast %166 : vector<2x1x32xf32> to vector<2x32xf32>
    %c0_58 = arith.constant 0 : index
    %c1728 = arith.constant 1728 : index
    %168 = vector.load %arg5[%c0_58, %c1728] : memref<2x2048xf32, #tpu.memory_space<vmem>>, vector<2x32xf32>
    tpu.vector_store %arg5[%c0_58, %c1728], %167 {strides = array<i32>} : memref<2x2048xf32, #tpu.memory_space<vmem>>, vector<2x32xf32>,
    %169 = vector.extract_strided_slice %3 {offsets = [0, 55, 0], sizes = [2, 1, 32], strides = [1, 1, 1]} : vector<2x64x32xf32> to vector<2x1x32xf32>
    %170 = vector.shape_cast %169 : vector<2x1x32xf32> to vector<2x32xf32>
    %c0_59 = arith.constant 0 : index
    %c1760 = arith.constant 1760 : index
    %171 = vector.load %arg5[%c0_59, %c1760] : memref<2x2048xf32, #tpu.memory_space<vmem>>, vector<2x32xf32>
    tpu.vector_store %arg5[%c0_59, %c1760], %170 {strides = array<i32>} : memref<2x2048xf32, #tpu.memory_space<vmem>>, vector<2x32xf32>,
    %172 = vector.extract_strided_slice %3 {offsets = [0, 56, 0], sizes = [2, 1, 32], strides = [1, 1, 1]} : vector<2x64x32xf32> to vector<2x1x32xf32>
    %173 = vector.shape_cast %172 : vector<2x1x32xf32> to vector<2x32xf32>
    %c0_60 = arith.constant 0 : index
    %c1792 = arith.constant 1792 : index
    %174 = vector.load %arg5[%c0_60, %c1792] : memref<2x2048xf32, #tpu.memory_space<vmem>>, vector<2x32xf32>
    tpu.vector_store %arg5[%c0_60, %c1792], %173 {strides = array<i32>} : memref<2x2048xf32, #tpu.memory_space<vmem>>, vector<2x32xf32>,
    %175 = vector.extract_strided_slice %3 {offsets = [0, 57, 0], sizes = [2, 1, 32], strides = [1, 1, 1]} : vector<2x64x32xf32> to vector<2x1x32xf32>
    %176 = vector.shape_cast %175 : vector<2x1x32xf32> to vector<2x32xf32>
    %c0_61 = arith.constant 0 : index
    %c1824 = arith.constant 1824 : index
    %177 = vector.load %arg5[%c0_61, %c1824] : memref<2x2048xf32, #tpu.memory_space<vmem>>, vector<2x32xf32>
    tpu.vector_store %arg5[%c0_61, %c1824], %176 {strides = array<i32>} : memref<2x2048xf32, #tpu.memory_space<vmem>>, vector<2x32xf32>,
    %178 = vector.extract_strided_slice %3 {offsets = [0, 58, 0], sizes = [2, 1, 32], strides = [1, 1, 1]} : vector<2x64x32xf32> to vector<2x1x32xf32>
    %179 = vector.shape_cast %178 : vector<2x1x32xf32> to vector<2x32xf32>
    %c0_62 = arith.constant 0 : index
    %c1856 = arith.constant 1856 : index
    %180 = vector.load %arg5[%c0_62, %c1856] : memref<2x2048xf32, #tpu.memory_space<vmem>>, vector<2x32xf32>
    tpu.vector_store %arg5[%c0_62, %c1856], %179 {strides = array<i32>} : memref<2x2048xf32, #tpu.memory_space<vmem>>, vector<2x32xf32>,
    %181 = vector.extract_strided_slice %3 {offsets = [0, 59, 0], sizes = [2, 1, 32], strides = [1, 1, 1]} : vector<2x64x32xf32> to vector<2x1x32xf32>
    %182 = vector.shape_cast %181 : vector<2x1x32xf32> to vector<2x32xf32>
    %c0_63 = arith.constant 0 : index
    %c1888 = arith.constant 1888 : index
    %183 = vector.load %arg5[%c0_63, %c1888] : memref<2x2048xf32, #tpu.memory_space<vmem>>, vector<2x32xf32>
    tpu.vector_store %arg5[%c0_63, %c1888], %182 {strides = array<i32>} : memref<2x2048xf32, #tpu.memory_space<vmem>>, vector<2x32xf32>,
    %184 = vector.extract_strided_slice %3 {offsets = [0, 60, 0], sizes = [2, 1, 32], strides = [1, 1, 1]} : vector<2x64x32xf32> to vector<2x1x32xf32>
    %185 = vector.shape_cast %184 : vector<2x1x32xf32> to vector<2x32xf32>
    %c0_64 = arith.constant 0 : index
    %c1920 = arith.constant 1920 : index
    %186 = vector.load %arg5[%c0_64, %c1920] : memref<2x2048xf32, #tpu.memory_space<vmem>>, vector<2x32xf32>
    tpu.vector_store %arg5[%c0_64, %c1920], %185 {strides = array<i32>} : memref<2x2048xf32, #tpu.memory_space<vmem>>, vector<2x32xf32>,
    %187 = vector.extract_strided_slice %3 {offsets = [0, 61, 0], sizes = [2, 1, 32], strides = [1, 1, 1]} : vector<2x64x32xf32> to vector<2x1x32xf32>
    %188 = vector.shape_cast %187 : vector<2x1x32xf32> to vector<2x32xf32>
    %c0_65 = arith.constant 0 : index
    %c1952 = arith.constant 1952 : index
    %189 = vector.load %arg5[%c0_65, %c1952] : memref<2x2048xf32, #tpu.memory_space<vmem>>, vector<2x32xf32>
    tpu.vector_store %arg5[%c0_65, %c1952], %188 {strides = array<i32>} : memref<2x2048xf32, #tpu.memory_space<vmem>>, vector<2x32xf32>,
    %190 = vector.extract_strided_slice %3 {offsets = [0, 62, 0], sizes = [2, 1, 32], strides = [1, 1, 1]} : vector<2x64x32xf32> to vector<2x1x32xf32>
    %191 = vector.shape_cast %190 : vector<2x1x32xf32> to vector<2x32xf32>
    %c0_66 = arith.constant 0 : index
    %c1984 = arith.constant 1984 : index
    %192 = vector.load %arg5[%c0_66, %c1984] : memref<2x2048xf32, #tpu.memory_space<vmem>>, vector<2x32xf32>
    tpu.vector_store %arg5[%c0_66, %c1984], %191 {strides = array<i32>} : memref<2x2048xf32, #tpu.memory_space<vmem>>, vector<2x32xf32>,
    %193 = vector.extract_strided_slice %3 {offsets = [0, 63, 0], sizes = [2, 1, 32], strides = [1, 1, 1]} : vector<2x64x32xf32> to vector<2x1x32xf32>
    %194 = vector.shape_cast %193 : vector<2x1x32xf32> to vector<2x32xf32>
    %c0_67 = arith.constant 0 : index
    %c2016 = arith.constant 2016 : index
    %195 = vector.load %arg5[%c0_67, %c2016] : memref<2x2048xf32, #tpu.memory_space<vmem>>, vector<2x32xf32>
    tpu.vector_store %arg5[%c0_67, %c2016], %194 {strides = array<i32>} : memref<2x2048xf32, #tpu.memory_space<vmem>>, vector<2x32xf32>,
    %c0_68 = arith.constant 0 : index
    %c0_69 = arith.constant 0 : index
    %196 = vector.load %arg5[%c0_68, %c0_69] : memref<2x2048xf32, #tpu.memory_space<vmem>>, vector<2x2048xf32>
    %c0_70 = arith.constant 0 : index
    %c0_71 = arith.constant 0 : index
    %197 = vector.load %arg3[%c0_70, %c0_71] : memref<2048x64xf32, #tpu.memory_space<vmem>>, vector<2048x64xf32>
    %cst_72 = arith.constant dense<0.000000e+00> : vector<2x64xf32>
    %198 = tpu.matmul %196, %197, %cst_72 {dimension_numbers = #tpu.dot_dimension_numbers<[1], [0], [0], [1], [0, 0, 1, 1], [], []>} : vector<2x2048xf32>, vector<2048x64xf32>, vector<2x64xf32> -> vector<2x64xf32>
    %c0_73 = arith.constant 0 : index
    %c0_74 = arith.constant 0 : index
    %199 = vector.load %arg4[%c0_73, %c0_74] : memref<2x64xf32, #tpu.memory_space<vmem>>, vector<2x64xf32>
    tpu.vector_store %arg4[%c0_73, %c0_74], %198 {strides = array<i32>} : memref<2x64xf32, #tpu.memory_space<vmem>>, vector<2x64xf32>,
    return
  }
  func.func @transform_0(%arg0: i32) -> (i32, i32) {
    %c0_i32 = arith.constant 0 : i32
    %c0_i32_0 = arith.constant 0 : i32
    return %arg0, %c0_i32 : i32, i32
  }
  func.func @transform_1(%arg0: i32) -> (i32, i32) {
    %c0_i32 = arith.constant 0 : i32
    %c0_i32_0 = arith.constant 0 : i32
    %c0_i32_1 = arith.constant 0 : i32
    return %c0_i32, %c0_i32_0 : i32, i32
  }
  func.func @transform_2(%arg0: i32) -> (i32, i32) {
    %c0_i32 = arith.constant 0 : i32
    %c0_i32_0 = arith.constant 0 : i32
    %c0_i32_1 = arith.constant 0 : i32
    return %c0_i32, %c0_i32_0 : i32, i32
  }
  func.func @transform_3(%arg0: i32) -> (i32, i32) {
    %c0_i32 = arith.constant 0 : i32
    %c0_i32_0 = arith.constant 0 : i32
    return %arg0, %c0_i32 : i32, i32
  }
}

</mosaic_0001>

<llo_original>
// kernel: cnn_forward.1
$region0: #{cnn_forward.1}
  #allocation0 [shape = 'u32[]', space=smem, size = 0x4, offset = 0x4, fixed_abs, tag = 'smem constant byte address 0x4 - core index']
  #allocation1 [shape = 'u32[144,128]{1,0:T(1,128)}', space=vmem, size = 0x12000, scoped, tag = 'internal scratch']
  #allocation2 [shape = 'f32[2,2048]{1,0:T(2,128)}', space=vmem, size = 0x4000, scoped, tag = 'scratch operand']
  %s0 = inlined_call_operand.hbm [shape: f32[128,192], index: 0, kind: input, shape index: {}]
  %s1 = inlined_call_operand.hbm [shape: f32[192,32], index: 1, kind: input, shape index: {}]
  %s2 = inlined_call_operand.hbm [shape: f32[2048,64], index: 2, kind: input, shape index: {}]
  %s3 = inlined_call_operand.hbm [shape: f32[2,64], index: 3, kind: output, shape index: {}]
  %s4 = sld [smem:[#allocation0]]
  $region34: #{cnn_forward.1} parent=0
    _
  %s6 = ssub.s32 1, %s4
  %s7 = scalar_select 0, %s6, %s4
  $region1: #{cnn_forward.1} parent=0
    #allocation3 [shape = 'u8[131072]{0}', space=vmem, size = 0x20000, scoped, tag = 'input window, operand 0, single buffered']
    #allocation4 [shape = 's32[1]{0}', space=sflag, size = 0x4, scoped, tag = 'scoped memory for cnn_forward.1']
    #allocation5 [shape = 's32[1]{0}', space=sflag, size = 0x4, scoped, tag = 'scoped memory for cnn_forward.1']
    #allocation6 [shape = 'u8[98304]{0}', space=vmem, size = 0x18000, scoped, tag = 'input window, operand 1, single buffered']
    #allocation7 [shape = 's32[1]{0}', space=sflag, size = 0x4, scoped, tag = 'scoped memory for cnn_forward.1']
    #allocation8 [shape = 'u8[1048576]{0}', space=vmem, size = 0x100000, scoped, tag = 'input window, operand 2, single buffered']
    #allocation9 [shape = 'u8[1024]{0}', space=vmem, size = 0x400, scoped, tag = 'output window, operand 0, single buffered']
    %8 = vsyncpa [#allocation4], 0
    %9 = vsyncpa [#allocation7], 0
    %10 = vsyncpa [#allocation5], 0
    // Predicated region
    $region2: #{cnn_forward.1} parent=1 // pred_check
      _
    $region3: #{cnn_forward.1} parent=1 // pred_check_branch
      %12 = sbr.rel (0) target = $region5
    $region4: #{cnn_forward.1} parent=1 // pred_region
      %s14 = ssub.s32 4096, 4096
      %15 = vsyncadd [#allocation4], %s14
      %s16 = sshll.u32 [#allocation3], 4
      %s17 = int_to_ptr.vmem [resolvable:$true] %s16
      %22 = dma.hbm_to_vmem [thread:$0]  %s0, 4096, %s17, [#allocation4], 256, 256, 16
    $region5: #{cnn_forward.1} parent=1 // pred_fallthru
      _
    // Predicated region
    $region6: #{cnn_forward.1} parent=1 // pred_check
      _
    $region7: #{cnn_forward.1} parent=1 // pred_check_branch
      %24 = sbr.rel (0) target = $region9
    $region8: #{cnn_forward.1} parent=1 // pred_region
      %s26 = ssub.s32 3072, 3072
      %27 = vsyncadd [#allocation7], %s26
      %s28 = sshll.u32 [#allocation6], 4
      %s29 = int_to_ptr.vmem [resolvable:$true] %s28
      %34 = dma.hbm_to_vmem [thread:$0]  %s1, 3072, %s29, [#allocation7], 128, 128, 8
    $region9: #{cnn_forward.1} parent=1 // pred_fallthru
      _
    // Predicated region
    $region10: #{cnn_forward.1} parent=1 // pred_check
      _
    $region11: #{cnn_forward.1} parent=1 // pred_check_branch
      %36 = sbr.rel (0) target = $region13
    $region12: #{cnn_forward.1} parent=1 // pred_region
      %s38 = ssub.s32 32768, 32768
      %39 = vsyncadd [#allocation7], %s38
      %s40 = sshll.u32 [#allocation8], 4
      %s41 = int_to_ptr.vmem [resolvable:$true] %s40
      %46 = dma.hbm_to_vmem [thread:$0]  %s2, 32768, %s41, [#allocation7], 128, 128, 8
    $region13: #{cnn_forward.1} parent=1 // pred_fallthru
      _
    // Predicated region
    $region14: #{cnn_forward.1} parent=1 // pred_check
      _
    $region15: #{cnn_forward.1} parent=1 // pred_check_branch
      %48 = sbr.rel (0) target = $region17
    $region16: #{cnn_forward.1} parent=1 // pred_region
      %49 = dma.done [#allocation4], 4096
    $region17: #{cnn_forward.1} parent=1 // pred_fallthru
      _
    // Predicated region
    $region18: #{cnn_forward.1} parent=1 // pred_check
      _
    $region19: #{cnn_forward.1} parent=1 // pred_check_branch
      %51 = sbr.rel (0) target = $region21
    $region20: #{cnn_forward.1} parent=1 // pred_region
      %52 = dma.done [#allocation7], 3072
    $region21: #{cnn_forward.1} parent=1 // pred_fallthru
      _
    // Predicated region
    $region22: #{cnn_forward.1} parent=1 // pred_check
      _
    $region23: #{cnn_forward.1} parent=1 // pred_check_branch
      %54 = sbr.rel (0) target = $region25
    $region24: #{cnn_forward.1} parent=1 // pred_region
      %55 = dma.done [#allocation7], 32768
    $region25: #{cnn_forward.1} parent=1 // pred_fallthru
      _
    %v56 = vld [vmem:[#allocation3] sm:$0xff]
    %v57 = vld [vmem:[#allocation3 + $0x8] sm:$0xff]
    %v58 = vld [vmem:[#allocation3 + $0x10] sm:$0xff]
    %v59 = vld [vmem:[#allocation3 + $0x18] sm:$0xff]
    %v60 = vld [vmem:[#allocation3 + $0x20] sm:$0xff]
    %v61 = vld [vmem:[#allocation3 + $0x28] sm:$0xff]
    %v62 = vld [vmem:[#allocation3 + $0x30] sm:$0xff]
    %v63 = vld [vmem:[#allocation3 + $0x38] sm:$0xff]
    %v64 = vld [vmem:[#allocation3 + $0x40] sm:$0xff]
    %v65 = vld [vmem:[#allocation3 + $0x48] sm:$0xff]
    %v66 = vld [vmem:[#allocation3 + $0x50] sm:$0xff]
    %v67 = vld [vmem:[#allocation3 + $0x58] sm:$0xff]
    %v68 = vld [vmem:[#allocation3 + $0x60] sm:$0xff]
    %v69 = vld [vmem:[#allocation3 + $0x68] sm:$0xff]
    %v70 = vld [vmem:[#allocation3 + $0x70] sm:$0xff]
    %v71 = vld [vmem:[#allocation3 + $0x78] sm:$0xff]
    %v72 = vld [vmem:[#allocation3 + $0x80] sm:$0xff]
    %v73 = vld [vmem:[#allocation3 + $0x88] sm:$0xff]
    %v74 = vld [vmem:[#allocation3 + $0x90] sm:$0xff]
    %v75 = vld [vmem:[#allocation3 + $0x98] sm:$0xff]
    %v76 = vld [vmem:[#allocation3 + $0xa0] sm:$0xff]
    %v77 = vld [vmem:[#allocation3 + $0xa8] sm:$0xff]
    %v78 = vld [vmem:[#allocation3 + $0xb0] sm:$0xff]
    %v79 = vld [vmem:[#allocation3 + $0xb8] sm:$0xff]
    %v80 = vld [vmem:[#allocation3 + $0xc0] sm:$0xff]
    %v81 = vld [vmem:[#allocation3 + $0xc8] sm:$0xff]
    %v82 = vld [vmem:[#allocation3 + $0xd0] sm:$0xff]
    %v83 = vld [vmem:[#allocation3 + $0xd8] sm:$0xff]
    %v84 = vld [vmem:[#allocation3 + $0xe0] sm:$0xff]
    %v85 = vld [vmem:[#allocation3 + $0xe8] sm:$0xff]
    %v86 = vld [vmem:[#allocation3 + $0xf0] sm:$0xff]
    %v87 = vld [vmem:[#allocation3 + $0xf8] sm:$0xff]
    %v88 = vld [vmem:[#allocation6] sm:$0xff]
    %v89 = vld [vmem:[#allocation6 + $0x8] sm:$0xff]
    %v90 = vld [vmem:[#allocation6 + $0x10] sm:$0xff]
    %v91 = vld [vmem:[#allocation6 + $0x18] sm:$0xff]
    %v92 = vld [vmem:[#allocation6 + $0x20] sm:$0xff]
    %v93 = vld [vmem:[#allocation6 + $0x28] sm:$0xff]
    %v94 = vld [vmem:[#allocation6 + $0x30] sm:$0xff]
    %v95 = vld [vmem:[#allocation6 + $0x38] sm:$0xff]
    %v96 = vld [vmem:[#allocation6 + $0x40] sm:$0xff]
    %v97 = vld [vmem:[#allocation6 + $0x48] sm:$0xff]
    %v98 = vld [vmem:[#allocation6 + $0x50] sm:$0xff]
    %v99 = vld [vmem:[#allocation6 + $0x58] sm:$0xff]
    %v100 = vld [vmem:[#allocation6 + $0x60] sm:$0xff]
    %v101 = vld [vmem:[#allocation6 + $0x68] sm:$0xff]
    %v102 = vld [vmem:[#allocation6 + $0x70] sm:$0xff]
    %v103 = vld [vmem:[#allocation6 + $0x78] sm:$0xff]
    %v104 = vld [vmem:[#allocation6 + $0x80] sm:$0xff]
    %v105 = vld [vmem:[#allocation6 + $0x88] sm:$0xff]
    %v106 = vld [vmem:[#allocation6 + $0x90] sm:$0xff]
    %v107 = vld [vmem:[#allocation6 + $0x98] sm:$0xff]
    %v108 = vld [vmem:[#allocation6 + $0xa0] sm:$0xff]
    %v109 = vld [vmem:[#allocation6 + $0xa8] sm:$0xff]
    %v110 = vld [vmem:[#allocation6 + $0xb0] sm:$0xff]
    %v111 = vld [vmem:[#allocation6 + $0xb8] sm:$0xff]
    %vm112 = vcmask 523264
    %v114 = vsel %vm112, %v57, 0
    %v117 = vsel %vm112, %v59, 0
    %v120 = vsel %vm112, %v61, 0
    %v123 = vsel %vm112, %v63, 0
    %v126 = vsel %vm112, %v65, 0
    %v129 = vsel %vm112, %v67, 0
    %v132 = vsel %vm112, %v69, 0
    %v135 = vsel %vm112, %v71, 0
    %v138 = vsel %vm112, %v73, 0
    %v141 = vsel %vm112, %v75, 0
    %v144 = vsel %vm112, %v77, 0
    %v147 = vsel %vm112, %v79, 0
    %v150 = vsel %vm112, %v81, 0
    %v153 = vsel %vm112, %v83, 0
    %v156 = vsel %vm112, %v85, 0
    %v159 = vsel %vm112, %v87, 0
    %161 = vmatprep.subr.mxu0 0.0
    %162 = vmatpush1.msra.mxu0 %v88
    %163 = vmatprep.subr.mxu0 0.0
    %164 = vmatpush1.msra.mxu0 %v89
    %165 = vmatprep.subr.mxu0 0.0
    %166 = vmatpush1.msra.mxu0 %v90
    %167 = vmatprep.subr.mxu0 0.0
    %168 = vmatpush1.msra.mxu0 %v91
    %169 = vmatprep.subr.mxu0 0.0
    %170 = vmatpush1.msra.mxu0 %v92
    %171 = vmatprep.subr.mxu0 0.0
    %172 = vmatpush1.msra.mxu0 %v93
    %173 = vmatprep.subr.mxu0 0.0
    %174 = vmatpush1.msra.mxu0 %v94
    %175 = vmatprep.subr.mxu0 0.0
    %176 = vmatpush1.msra.mxu0 %v95
    %177 = vmatprep.subr.mxu0 0.0
    %178 = vmatpush1.msra.mxu0 %v96
    %179 = vmatprep.subr.mxu0 0.0
    %180 = vmatpush1.msra.mxu0 %v97
    %181 = vmatprep.subr.mxu0 0.0
    %182 = vmatpush1.msra.mxu0 %v98
    %183 = vmatprep.subr.mxu0 0.0
    %184 = vmatpush1.msra.mxu0 %v99
    %185 = vmatprep.subr.mxu0 0.0
    %186 = vmatpush1.msra.mxu0 %v100
    %187 = vmatprep.subr.mxu0 0.0
    %188 = vmatpush1.msra.mxu0 %v101
    %189 = vmatprep.subr.mxu0 0.0
    %190 = vmatpush1.msra.mxu0 %v102
    %191 = vmatprep.subr.mxu0 0.0
    %192 = vmatpush1.msra.mxu0 %v103
    %193 = vmatprep.subr.mxu0 0.0
    %194 = vmatpush1.msra.mxu0 %v104
    %195 = vmatprep.subr.mxu0 0.0
    %196 = vmatpush1.msra.mxu0 %v105
    %197 = vmatprep.subr.mxu0 0.0
    %198 = vmatpush1.msra.mxu0 %v106
    %199 = vmatprep.subr.mxu0 0.0
    %200 = vmatpush1.msra.mxu0 %v107
    %201 = vmatprep.subr.mxu0 0.0
    %202 = vmatpush1.msra.mxu0 %v108
    %203 = vmatprep.subr.mxu0 0.0
    %204 = vmatpush1.msra.mxu0 %v109
    %205 = vmatprep.subr.mxu0 0.0
    %206 = vmatpush1.msra.mxu0 %v110
    %207 = vmatprep.subr.mxu0 0.0
    %208 = vmatpush1.msra.mxu0 %v111
    %209 = vmatprep.subr.mxu0 0.0
    %210 = vmatpush1.msra.mxu0 0.0
    %211 = vmatprep.subr.mxu0 0.0
    %212 = vmatpush1.msra.mxu0 0.0
    %213 = vmatprep.subr.mxu0 0.0
    %214 = vmatpush1.msra.mxu0 0.0
    %215 = vmatprep.subr.mxu0 0.0
    %216 = vmatpush1.msra.mxu0 0.0
    %217 = vmatprep.subr.mxu0 0.0
    %218 = vmatpush1.msra.mxu0 0.0
    %219 = vmatprep.subr.mxu0 0.0
    %220 = vmatpush1.msra.mxu0 0.0
    %221 = vmatprep.subr.mxu0 0.0
    %222 = vmatpush1.msra.mxu0 0.0
    %223 = vmatprep.subr.mxu0 0.0
    %224 = vmatpush1.msra.mxu0 0.0
    %225 = vmatprep.mubr.f32.mxu0 %v114
    %226 = vmatmul.mubr.f32.gmra.mrb[0].mxu0 %v56
    %v227 = vpop.f32.mrb[0].mxu0
    %v228 = vadd.f32 0.0, %v227
    %v229 = vpop.f32.mrb[0].mxu0
    %230 = vmatprep.mubr.f32.mxu0 %v117
    %231 = vmatmul.mubr.f32.gmra.mrb[0].mxu0 %v58
    %v232 = vpop.f32.mrb[0].mxu0
    %v233 = vadd.f32 0.0, %v232
    %v234 = vpop.f32.mrb[0].mxu0
    %235 = vmatprep.mubr.f32.mxu0 %v120
    %236 = vmatmul.mubr.f32.gmra.mrb[0].mxu0 %v60
    %v237 = vpop.f32.mrb[0].mxu0
    %v238 = vadd.f32 0.0, %v237
    %v239 = vpop.f32.mrb[0].mxu0
    %240 = vmatprep.mubr.f32.mxu0 %v123
    %241 = vmatmul.mubr.f32.gmra.mrb[0].mxu0 %v62
    %v242 = vpop.f32.mrb[0].mxu0
    %v243 = vadd.f32 0.0, %v242
    %v244 = vpop.f32.mrb[0].mxu0
    %245 = vmatprep.mubr.f32.mxu0 %v126
    %246 = vmatmul.mubr.f32.gmra.mrb[0].mxu0 %v64
    %v247 = vpop.f32.mrb[0].mxu0
    %v248 = vadd.f32 0.0, %v247
    %v249 = vpop.f32.mrb[0].mxu0
    %250 = vmatprep.mubr.f32.mxu0 %v129
    %251 = vmatmul.mubr.f32.gmra.mrb[0].mxu0 %v66
    %v252 = vpop.f32.mrb[0].mxu0
    %v253 = vadd.f32 0.0, %v252
    %v254 = vpop.f32.mrb[0].mxu0
    %255 = vmatprep.mubr.f32.mxu0 %v132
    %256 = vmatmul.mubr.f32.gmra.mrb[0].mxu0 %v68
    %v257 = vpop.f32.mrb[0].mxu0
    %v258 = vadd.f32 0.0, %v257
    %v259 = vpop.f32.mrb[0].mxu0
    %260 = vmatprep.mubr.f32.mxu0 %v135
    %261 = vmatmul.mubr.f32.gmra.mrb[0].mxu0 %v70
    %v262 = vpop.f32.mrb[0].mxu0
    %v263 = vadd.f32 0.0, %v262
    %v264 = vpop.f32.mrb[0].mxu0
    %265 = vmatprep.mubr.f32.mxu0 %v138
    %266 = vmatmul.mubr.f32.gmra.mrb[0].mxu0 %v72
    %v267 = vpop.f32.mrb[0].mxu0
    %v268 = vadd.f32 0.0, %v267
    %v269 = vpop.f32.mrb[0].mxu0
    %270 = vmatprep.mubr.f32.mxu0 %v141
    %271 = vmatmul.mubr.f32.gmra.mrb[0].mxu0 %v74
    %v272 = vpop.f32.mrb[0].mxu0
    %v273 = vadd.f32 0.0, %v272
    %v274 = vpop.f32.mrb[0].mxu0
    %275 = vmatprep.mubr.f32.mxu0 %v144
    %276 = vmatmul.mubr.f32.gmra.mrb[0].mxu0 %v76
    %v277 = vpop.f32.mrb[0].mxu0
    %v278 = vadd.f32 0.0, %v277
    %v279 = vpop.f32.mrb[0].mxu0
    %280 = vmatprep.mubr.f32.mxu0 %v147
    %281 = vmatmul.mubr.f32.gmra.mrb[0].mxu0 %v78
    %v282 = vpop.f32.mrb[0].mxu0
    %v283 = vadd.f32 0.0, %v282
    %v284 = vpop.f32.mrb[0].mxu0
    %285 = vmatprep.mubr.f32.mxu0 %v150
    %286 = vmatmul.mubr.f32.gmra.mrb[0].mxu0 %v80
    %v287 = vpop.f32.mrb[0].mxu0
    %v288 = vadd.f32 0.0, %v287
    %v289 = vpop.f32.mrb[0].mxu0
    %290 = vmatprep.mubr.f32.mxu0 %v153
    %291 = vmatmul.mubr.f32.gmra.mrb[0].mxu0 %v82
    %v292 = vpop.f32.mrb[0].mxu0
    %v293 = vadd.f32 0.0, %v292
    %v294 = vpop.f32.mrb[0].mxu0
    %295 = vmatprep.mubr.f32.mxu0 %v156
    %296 = vmatmul.mubr.f32.gmra.mrb[0].mxu0 %v84
    %v297 = vpop.f32.mrb[0].mxu0
    %v298 = vadd.f32 0.0, %v297
    %v299 = vpop.f32.mrb[0].mxu0
    %300 = vmatprep.mubr.f32.mxu0 %v159
    %301 = vmatmul.mubr.f32.gmra.mrb[0].mxu0 %v86
    %v302 = vpop.f32.mrb[0].mxu0
    %v303 = vadd.f32 0.0, %v302
    %v304 = vpop.f32.mrb[0].mxu0
    %305 = vdwg.mxu0
    %v309 = vunpack.c.l.s4 1983009808
    %v310 = vunpack.c.0.s8 %v309
    %v311 = vlaneseq
    %v312 = vshrl.u32 %v311, 7
    %v313 = vsub.s32 %v310, %v312
    %v314 = vrot.slane %v228, %v313
    %v316 = vunpack.c.l.s4 1983009808
    %v317 = vunpack.c.0.s8 %v316
    %v318 = vlaneseq
    %v319 = vshrl.u32 %v318, 7
    %v320 = vsub.s32 %v317, %v319
    %v321 = vrot.slane %v268, %v320
    %vm322 = vcmask 1044484
    %v323 = vsel %vm322, %v314, %v314
    %vm324 = vcmask 1046534
    %v325 = vsel %vm324, %v314, %v323
    %v326 = vrot.slane %v321, 7
    %vm327 = vcmask 1041409
    %v328 = vsel %vm327, %v326, %v325
    %vm329 = vcmask 1043459
    %v330 = vsel %vm329, %v326, %v328
    %vm331 = vcmask 1045509
    %v332 = vsel %vm331, %v326, %v330
    %vm333 = vcmask 1047559
    %v334 = vsel %vm333, %v326, %v332
    %vm336 = vcmask 254976
    %337 = vst.msk [vmem:[#allocation2] sm:$0x3] %vm336, %v334
    %v338 = vrot.slane %v314, 1
    %v339 = vsel %vm322, %v338, %v338
    %v340 = vsel %vm324, %v338, %v339
    %v341 = vsel %vm327, %v321, %v340
    %v342 = vsel %vm329, %v321, %v341
    %v343 = vsel %vm331, %v321, %v342
    %v344 = vsel %vm333, %v321, %v343
    %345 = vrot.lane.b32.xlu0 %v344, 32
    %v346 = vpop.permute.xlu0 %345
    %vm348 = vcmask 517376
    %349 = vst.msk [vmem:[#allocation2] sm:$0x3] %vm348, %v346
    %v350 = vcombine.high %v314, %v314
    %v351 = vcombine.high %v321, %v321
    %v352 = vsel %vm322, %v350, %v350
    %v353 = vsel %vm324, %v350, %v352
    %v354 = vrot.slane %v351, 7
    %v355 = vsel %vm327, %v354, %v353
    %v356 = vsel %vm329, %v354, %v355
    %v357 = vsel %vm331, %v354, %v356
    %v358 = vsel %vm333, %v354, %v357
    %359 = vrot.lane.b32.xlu0 %v358, 64
    %v360 = vpop.permute.xlu0 %359
    %vm362 = vcmask 779776
    %363 = vst.msk [vmem:[#allocation2] sm:$0x3] %vm362, %v360
    %v364 = vrot.slane %v350, 1
    %v365 = vsel %vm322, %v364, %v364
    %v366 = vsel %vm324, %v364, %v365
    %v367 = vsel %vm327, %v351, %v366
    %v368 = vsel %vm329, %v351, %v367
    %v369 = vsel %vm331, %v351, %v368
    %v370 = vsel %vm333, %v351, %v369
    %371 = vrot.lane.b32.xlu0 %v370, 96
    %v372 = vpop.permute.xlu0 %371
    %vm374 = vcmask 1042176
    %375 = vst.msk [vmem:[#allocation2] sm:$0x3] %vm374, %v372
    %v376 = vcombine.high %v228, %v228
    %v378 = vunpack.c.l.s4 1983009808
    %v379 = vunpack.c.0.s8 %v378
    %v380 = vlaneseq
    %v381 = vshrl.u32 %v380, 7
    %v382 = vsub.s32 %v379, %v381
    %v383 = vrot.slane %v376, %v382
    %v384 = vcombine.high %v268, %v268
    %v386 = vunpack.c.l.s4 1983009808
    %v387 = vunpack.c.0.s8 %v386
    %v388 = vlaneseq
    %v389 = vshrl.u32 %v388, 7
    %v390 = vsub.s32 %v387, %v389
    %v391 = vrot.slane %v384, %v390
    %v392 = vsel %vm322, %v383, %v383
    %v393 = vsel %vm324, %v383, %v392
    %v394 = vrot.slane %v391, 7
    %v395 = vsel %vm327, %v394, %v393
    %v396 = vsel %vm329, %v394, %v395
    %v397 = vsel %vm331, %v394, %v396
    %v398 = vsel %vm333, %v394, %v397
    %400 = vst.msk [vmem:[#allocation2 + $0x2] sm:$0x3] %vm336, %v398
    %v401 = vrot.slane %v383, 1
    %v402 = vsel %vm322, %v401, %v401
    %v403 = vsel %vm324, %v401, %v402
    %v404 = vsel %vm327, %v391, %v403
    %v405 = vsel %vm329, %v391, %v404
    %v406 = vsel %vm331, %v391, %v405
    %v407 = vsel %vm333, %v391, %v406
    %408 = vrot.lane.b32.xlu0 %v407, 32
    %v409 = vpop.permute.xlu0 %408
    %411 = vst.msk [vmem:[#allocation2 + $0x2] sm:$0x3] %vm348, %v409
    %v412 = vcombine.high %v383, %v383
    %v413 = vcombine.high %v391, %v391
    %v414 = vsel %vm322, %v412, %v412
    %v415 = vsel %vm324, %v412, %v414
    %v416 = vrot.slane %v413, 7
    %v417 = vsel %vm327, %v416, %v415
    %v418 = vsel %vm329, %v416, %v417
    %v419 = vsel %vm331, %v416, %v418
    %v420 = vsel %vm333, %v416, %v419
    %421 = vrot.lane.b32.xlu0 %v420, 64
    %v422 = vpop.permute.xlu0 %421
    %424 = vst.msk [vmem:[#allocation2 + $0x2] sm:$0x3] %vm362, %v422
    %v425 = vrot.slane %v412, 1
    %v426 = vsel %vm322, %v425, %v425
    %v427 = vsel %vm324, %v425, %v426
    %v428 = vsel %vm327, %v413, %v427
    %v429 = vsel %vm329, %v413, %v428
    %v430 = vsel %vm331, %v413, %v429
    %v431 = vsel %vm333, %v413, %v430
    %432 = vrot.lane.b32.xlu0 %v431, 96
    %v433 = vpop.permute.xlu0 %432
    %435 = vst.msk [vmem:[#allocation2 + $0x2] sm:$0x3] %vm374, %v433
    %v439 = vunpack.c.l.s4 1983009808
    %v440 = vunpack.c.0.s8 %v439
    %v441 = vlaneseq
    %v442 = vshrl.u32 %v441, 7
    %v443 = vsub.s32 %v440, %v442
    %v444 = vrot.slane %v233, %v443
    %v446 = vunpack.c.l.s4 1983009808
    %v447 = vunpack.c.0.s8 %v446
    %v448 = vlaneseq
    %v449 = vshrl.u32 %v448, 7
    %v450 = vsub.s32 %v447, %v449
    %v451 = vrot.slane %v273, %v450
    %v452 = vsel %vm322, %v444, %v444
    %v453 = vsel %vm324, %v444, %v452
    %v454 = vrot.slane %v451, 7
    %v455 = vsel %vm327, %v454, %v453
    %v456 = vsel %vm329, %v454, %v455
    %v457 = vsel %vm331, %v454, %v456
    %v458 = vsel %vm333, %v454, %v457
    %460 = vst.msk [vmem:[#allocation2 + $0x4] sm:$0x3] %vm336, %v458
    %v461 = vrot.slane %v444, 1
    %v462 = vsel %vm322, %v461, %v461
    %v463 = vsel %vm324, %v461, %v462
    %v464 = vsel %vm327, %v451, %v463
    %v465 = vsel %vm329, %v451, %v464
    %v466 = vsel %vm331, %v451, %v465
    %v467 = vsel %vm333, %v451, %v466
    %468 = vrot.lane.b32.xlu0 %v467, 32
    %v469 = vpop.permute.xlu0 %468
    %471 = vst.msk [vmem:[#allocation2 + $0x4] sm:$0x3] %vm348, %v469
    %v472 = vcombine.high %v444, %v444
    %v473 = vcombine.high %v451, %v451
    %v474 = vsel %vm322, %v472, %v472
    %v475 = vsel %vm324, %v472, %v474
    %v476 = vrot.slane %v473, 7
    %v477 = vsel %vm327, %v476, %v475
    %v478 = vsel %vm329, %v476, %v477
    %v479 = vsel %vm331, %v476, %v478
    %v480 = vsel %vm333, %v476, %v479
    %481 = vrot.lane.b32.xlu0 %v480, 64
    %v482 = vpop.permute.xlu0 %481
    %484 = vst.msk [vmem:[#allocation2 + $0x4] sm:$0x3] %vm362, %v482
    %v485 = vrot.slane %v472, 1
    %v486 = vsel %vm322, %v485, %v485
    %v487 = vsel %vm324, %v485, %v486
    %v488 = vsel %vm327, %v473, %v487
    %v489 = vsel %vm329, %v473, %v488
    %v490 = vsel %vm331, %v473, %v489
    %v491 = vsel %vm333, %v473, %v490
    %492 = vrot.lane.b32.xlu0 %v491, 96
    %v493 = vpop.permute.xlu0 %492
    %495 = vst.msk [vmem:[#allocation2 + $0x4] sm:$0x3] %vm374, %v493
    %v496 = vcombine.high %v233, %v233
    %v498 = vunpack.c.l.s4 1983009808
    %v499 = vunpack.c.0.s8 %v498
    %v500 = vlaneseq
    %v501 = vshrl.u32 %v500, 7
    %v502 = vsub.s32 %v499, %v501
    %v503 = vrot.slane %v496, %v502
    %v504 = vcombine.high %v273, %v273
    %v506 = vunpack.c.l.s4 1983009808
    %v507 = vunpack.c.0.s8 %v506
    %v508 = vlaneseq
    %v509 = vshrl.u32 %v508, 7
    %v510 = vsub.s32 %v507, %v509
    %v511 = vrot.slane %v504, %v510
    %v512 = vsel %vm322, %v503, %v503
    %v513 = vsel %vm324, %v503, %v512
    %v514 = vrot.slane %v511, 7
    %v515 = vsel %vm327, %v514, %v513
    %v516 = vsel %vm329, %v514, %v515
    %v517 = vsel %vm331, %v514, %v516
    %v518 = vsel %vm333, %v514, %v517
    %520 = vst.msk [vmem:[#allocation2 + $0x6] sm:$0x3] %vm336, %v518
    %v521 = vrot.slane %v503, 1
    %v522 = vsel %vm322, %v521, %v521
    %v523 = vsel %vm324, %v521, %v522
    %v524 = vsel %vm327, %v511, %v523
    %v525 = vsel %vm329, %v511, %v524
    %v526 = vsel %vm331, %v511, %v525
    %v527 = vsel %vm333, %v511, %v526
    %528 = vrot.lane.b32.xlu0 %v527, 32
    %v529 = vpop.permute.xlu0 %528
    %531 = vst.msk [vmem:[#allocation2 + $0x6] sm:$0x3] %vm348, %v529
    %v532 = vcombine.high %v503, %v503
    %v533 = vcombine.high %v511, %v511
    %v534 = vsel %vm322, %v532, %v532
    %v535 = vsel %vm324, %v532, %v534
    %v536 = vrot.slane %v533, 7
    %v537 = vsel %vm327, %v536, %v535
    %v538 = vsel %vm329, %v536, %v537
    %v539 = vsel %vm331, %v536, %v538
    %v540 = vsel %vm333, %v536, %v539
    %541 = vrot.lane.b32.xlu0 %v540, 64
    %v542 = vpop.permute.xlu0 %541
    %544 = vst.msk [vmem:[#allocation2 + $0x6] sm:$0x3] %vm362, %v542
    %v545 = vrot.slane %v532, 1
    %v546 = vsel %vm322, %v545, %v545
    %v547 = vsel %vm324, %v545, %v546
    %v548 = vsel %vm327, %v533, %v547
    %v549 = vsel %vm329, %v533, %v548
    %v550 = vsel %vm331, %v533, %v549
    %v551 = vsel %vm333, %v533, %v550
    %552 = vrot.lane.b32.xlu0 %v551, 96
    %v553 = vpop.permute.xlu0 %552
    %555 = vst.msk [vmem:[#allocation2 + $0x6] sm:$0x3] %vm374, %v553
    %v559 = vunpack.c.l.s4 1983009808
    %v560 = vunpack.c.0.s8 %v559
    %v561 = vlaneseq
    %v562 = vshrl.u32 %v561, 7
    %v563 = vsub.s32 %v560, %v562
    %v564 = vrot.slane %v238, %v563
    %v566 = vunpack.c.l.s4 1983009808
    %v567 = vunpack.c.0.s8 %v566
    %v568 = vlaneseq
    %v569 = vshrl.u32 %v568, 7
    %v570 = vsub.s32 %v567, %v569
    %v571 = vrot.slane %v278, %v570
    %v572 = vsel %vm322, %v564, %v564
    %v573 = vsel %vm324, %v564, %v572
    %v574 = vrot.slane %v571, 7
    %v575 = vsel %vm327, %v574, %v573
    %v576 = vsel %vm329, %v574, %v575
    %v577 = vsel %vm331, %v574, %v576
    %v578 = vsel %vm333, %v574, %v577
    %580 = vst.msk [vmem:[#allocation2 + $0x8] sm:$0x3] %vm336, %v578
    %v581 = vrot.slane %v564, 1
    %v582 = vsel %vm322, %v581, %v581
    %v583 = vsel %vm324, %v581, %v582
    %v584 = vsel %vm327, %v571, %v583
    %v585 = vsel %vm329, %v571, %v584
    %v586 = vsel %vm331, %v571, %v585
    %v587 = vsel %vm333, %v571, %v586
    %588 = vrot.lane.b32.xlu0 %v587, 32
    %v589 = vpop.permute.xlu0 %588
    %591 = vst.msk [vmem:[#allocation2 + $0x8] sm:$0x3] %vm348, %v589
    %v592 = vcombine.high %v564, %v564
    %v593 = vcombine.high %v571, %v571
    %v594 = vsel %vm322, %v592, %v592
    %v595 = vsel %vm324, %v592, %v594
    %v596 = vrot.slane %v593, 7
    %v597 = vsel %vm327, %v596, %v595
    %v598 = vsel %vm329, %v596, %v597
    %v599 = vsel %vm331, %v596, %v598
    %v600 = vsel %vm333, %v596, %v599
    %601 = vrot.lane.b32.xlu0 %v600, 64
    %v602 = vpop.permute.xlu0 %601
    %604 = vst.msk [vmem:[#allocation2 + $0x8] sm:$0x3] %vm362, %v602
    %v605 = vrot.slane %v592, 1
    %v606 = vsel %vm322, %v605, %v605
    %v607 = vsel %vm324, %v605, %v606
    %v608 = vsel %vm327, %v593, %v607
    %v609 = vsel %vm329, %v593, %v608
    %v610 = vsel %vm331, %v593, %v609
    %v611 = vsel %vm333, %v593, %v610
    %612 = vrot.lane.b32.xlu0 %v611, 96
    %v613 = vpop.permute.xlu0 %612
    %615 = vst.msk [vmem:[#allocation2 + $0x8] sm:$0x3] %vm374, %v613
    %v616 = vcombine.high %v238, %v238
    %v618 = vunpack.c.l.s4 1983009808
    %v619 = vunpack.c.0.s8 %v618
    %v620 = vlaneseq
    %v621 = vshrl.u32 %v620, 7
    %v622 = vsub.s32 %v619, %v621
    %v623 = vrot.slane %v616, %v622
    %v624 = vcombine.high %v278, %v278
    %v626 = vunpack.c.l.s4 1983009808
    %v627 = vunpack.c.0.s8 %v626
    %v628 = vlaneseq
    %v629 = vshrl.u32 %v628, 7
    %v630 = vsub.s32 %v627, %v629
    %v631 = vrot.slane %v624, %v630
    %v632 = vsel %vm322, %v623, %v623
    %v633 = vsel %vm324, %v623, %v632
    %v634 = vrot.slane %v631, 7
    %v635 = vsel %vm327, %v634, %v633
    %v636 = vsel %vm329, %v634, %v635
    %v637 = vsel %vm331, %v634, %v636
    %v638 = vsel %vm333, %v634, %v637
    %640 = vst.msk [vmem:[#allocation2 + $0xa] sm:$0x3] %vm336, %v638
    %v641 = vrot.slane %v623, 1
    %v642 = vsel %vm322, %v641, %v641
    %v643 = vsel %vm324, %v641, %v642
    %v644 = vsel %vm327, %v631, %v643
    %v645 = vsel %vm329, %v631, %v644
    %v646 = vsel %vm331, %v631, %v645
    %v647 = vsel %vm333, %v631, %v646
    %648 = vrot.lane.b32.xlu0 %v647, 32
    %v649 = vpop.permute.xlu0 %648
    %651 = vst.msk [vmem:[#allocation2 + $0xa] sm:$0x3] %vm348, %v649
    %v652 = vcombine.high %v623, %v623
    %v653 = vcombine.high %v631, %v631
    %v654 = vsel %vm322, %v652, %v652
    %v655 = vsel %vm324, %v652, %v654
    %v656 = vrot.slane %v653, 7
    %v657 = vsel %vm327, %v656, %v655
    %v658 = vsel %vm329, %v656, %v657
    %v659 = vsel %vm331, %v656, %v658
    %v660 = vsel %vm333, %v656, %v659
    %661 = vrot.lane.b32.xlu0 %v660, 64
    %v662 = vpop.permute.xlu0 %661
    %664 = vst.msk [vmem:[#allocation2 + $0xa] sm:$0x3] %vm362, %v662
    %v665 = vrot.slane %v652, 1
    %v666 = vsel %vm322, %v665, %v665
    %v667 = vsel %vm324, %v665, %v666
    %v668 = vsel %vm327, %v653, %v667
    %v669 = vsel %vm329, %v653, %v668
    %v670 = vsel %vm331, %v653, %v669
    %v671 = vsel %vm333, %v653, %v670
    %672 = vrot.lane.b32.xlu0 %v671, 96
    %v673 = vpop.permute.xlu0 %672
    %675 = vst.msk [vmem:[#allocation2 + $0xa] sm:$0x3] %vm374, %v673
    %v679 = vunpack.c.l.s4 1983009808
    %v680 = vunpack.c.0.s8 %v679
    %v681 = vlaneseq
    %v682 = vshrl.u32 %v681, 7
    %v683 = vsub.s32 %v680, %v682
    %v684 = vrot.slane %v243, %v683
    %v686 = vunpack.c.l.s4 1983009808
    %v687 = vunpack.c.0.s8 %v686
    %v688 = vlaneseq
    %v689 = vshrl.u32 %v688, 7
    %v690 = vsub.s32 %v687, %v689
    %v691 = vrot.slane %v283, %v690
    %v692 = vsel %vm322, %v684, %v684
    %v693 = vsel %vm324, %v684, %v692
    %v694 = vrot.slane %v691, 7
    %v695 = vsel %vm327, %v694, %v693
    %v696 = vsel %vm329, %v694, %v695
    %v697 = vsel %vm331, %v694, %v696
    %v698 = vsel %vm333, %v694, %v697
    %700 = vst.msk [vmem:[#allocation2 + $0xc] sm:$0x3] %vm336, %v698
    %v701 = vrot.slane %v684, 1
    %v702 = vsel %vm322, %v701, %v701
    %v703 = vsel %vm324, %v701, %v702
    %v704 = vsel %vm327, %v691, %v703
    %v705 = vsel %vm329, %v691, %v704
    %v706 = vsel %vm331, %v691, %v705
    %v707 = vsel %vm333, %v691, %v706
    %708 = vrot.lane.b32.xlu0 %v707, 32
    %v709 = vpop.permute.xlu0 %708
    %711 = vst.msk [vmem:[#allocation2 + $0xc] sm:$0x3] %vm348, %v709
    %v712 = vcombine.high %v684, %v684
    %v713 = vcombine.high %v691, %v691
    %v714 = vsel %vm322, %v712, %v712
    %v715 = vsel %vm324, %v712, %v714
    %v716 = vrot.slane %v713, 7
    %v717 = vsel %vm327, %v716, %v715
    %v718 = vsel %vm329, %v716, %v717
    %v719 = vsel %vm331, %v716, %v718
    %v720 = vsel %vm333, %v716, %v719
    %721 = vrot.lane.b32.xlu0 %v720, 64
    %v722 = vpop.permute.xlu0 %721
    %724 = vst.msk [vmem:[#allocation2 + $0xc] sm:$0x3] %vm362, %v722
    %v725 = vrot.slane %v712, 1
    %v726 = vsel %vm322, %v725, %v725
    %v727 = vsel %vm324, %v725, %v726
    %v728 = vsel %vm327, %v713, %v727
    %v729 = vsel %vm329, %v713, %v728
    %v730 = vsel %vm331, %v713, %v729
    %v731 = vsel %vm333, %v713, %v730
    %732 = vrot.lane.b32.xlu0 %v731, 96
    %v733 = vpop.permute.xlu0 %732
    %735 = vst.msk [vmem:[#allocation2 + $0xc] sm:$0x3] %vm374, %v733
    %v736 = vcombine.high %v243, %v243
    %v738 = vunpack.c.l.s4 1983009808
    %v739 = vunpack.c.0.s8 %v738
    %v740 = vlaneseq
    %v741 = vshrl.u32 %v740, 7
    %v742 = vsub.s32 %v739, %v741
    %v743 = vrot.slane %v736, %v742
    %v744 = vcombine.high %v283, %v283
    %v746 = vunpack.c.l.s4 1983009808
    %v747 = vunpack.c.0.s8 %v746
    %v748 = vlaneseq
    %v749 = vshrl.u32 %v748, 7
    %v750 = vsub.s32 %v747, %v749
    %v751 = vrot.slane %v744, %v750
    %v752 = vsel %vm322, %v743, %v743
    %v753 = vsel %vm324, %v743, %v752
    %v754 = vrot.slane %v751, 7
    %v755 = vsel %vm327, %v754, %v753
    %v756 = vsel %vm329, %v754, %v755
    %v757 = vsel %vm331, %v754, %v756
    %v758 = vsel %vm333, %v754, %v757
    %760 = vst.msk [vmem:[#allocation2 + $0xe] sm:$0x3] %vm336, %v758
    %v761 = vrot.slane %v743, 1
    %v762 = vsel %vm322, %v761, %v761
    %v763 = vsel %vm324, %v761, %v762
    %v764 = vsel %vm327, %v751, %v763
    %v765 = vsel %vm329, %v751, %v764
    %v766 = vsel %vm331, %v751, %v765
    %v767 = vsel %vm333, %v751, %v766
    %768 = vrot.lane.b32.xlu0 %v767, 32
    %v769 = vpop.permute.xlu0 %768
    %771 = vst.msk [vmem:[#allocation2 + $0xe] sm:$0x3] %vm348, %v769
    %v772 = vcombine.high %v743, %v743
    %v773 = vcombine.high %v751, %v751
    %v774 = vsel %vm322, %v772, %v772
    %v775 = vsel %vm324, %v772, %v774
    %v776 = vrot.slane %v773, 7
    %v777 = vsel %vm327, %v776, %v775
    %v778 = vsel %vm329, %v776, %v777
    %v779 = vsel %vm331, %v776, %v778
    %v780 = vsel %vm333, %v776, %v779
    %781 = vrot.lane.b32.xlu0 %v780, 64
    %v782 = vpop.permute.xlu0 %781
    %784 = vst.msk [vmem:[#allocation2 + $0xe] sm:$0x3] %vm362, %v782
    %v785 = vrot.slane %v772, 1
    %v786 = vsel %vm322, %v785, %v785
    %v787 = vsel %vm324, %v785, %v786
    %v788 = vsel %vm327, %v773, %v787
    %v789 = vsel %vm329, %v773, %v788
    %v790 = vsel %vm331, %v773, %v789
    %v791 = vsel %vm333, %v773, %v790
    %792 = vrot.lane.b32.xlu0 %v791, 96
    %v793 = vpop.permute.xlu0 %792
    %795 = vst.msk [vmem:[#allocation2 + $0xe] sm:$0x3] %vm374, %v793
    %v799 = vunpack.c.l.s4 1983009808
    %v800 = vunpack.c.0.s8 %v799
    %v801 = vlaneseq
    %v802 = vshrl.u32 %v801, 7
    %v803 = vsub.s32 %v800, %v802
    %v804 = vrot.slane %v248, %v803
    %v806 = vunpack.c.l.s4 1983009808
    %v807 = vunpack.c.0.s8 %v806
    %v808 = vlaneseq
    %v809 = vshrl.u32 %v808, 7
    %v810 = vsub.s32 %v807, %v809
    %v811 = vrot.slane %v288, %v810
    %v812 = vsel %vm322, %v804, %v804
    %v813 = vsel %vm324, %v804, %v812
    %v814 = vrot.slane %v811, 7
    %v815 = vsel %vm327, %v814, %v813
    %v816 = vsel %vm329, %v814, %v815
    %v817 = vsel %vm331, %v814, %v816
    %v818 = vsel %vm333, %v814, %v817
    %820 = vst.msk [vmem:[#allocation2 + $0x10] sm:$0x3] %vm336, %v818
    %v821 = vrot.slane %v804, 1
    %v822 = vsel %vm322, %v821, %v821
    %v823 = vsel %vm324, %v821, %v822
    %v824 = vsel %vm327, %v811, %v823
    %v825 = vsel %vm329, %v811, %v824
    %v826 = vsel %vm331, %v811, %v825
    %v827 = vsel %vm333, %v811, %v826
    %828 = vrot.lane.b32.xlu0 %v827, 32
    %v829 = vpop.permute.xlu0 %828
    %831 = vst.msk [vmem:[#allocation2 + $0x10] sm:$0x3] %vm348, %v829
    %v832 = vcombine.high %v804, %v804
    %v833 = vcombine.high %v811, %v811
    %v834 = vsel %vm322, %v832, %v832
    %v835 = vsel %vm324, %v832, %v834
    %v836 = vrot.slane %v833, 7
    %v837 = vsel %vm327, %v836, %v835
    %v838 = vsel %vm329, %v836, %v837
    %v839 = vsel %vm331, %v836, %v838
    %v840 = vsel %vm333, %v836, %v839
    %841 = vrot.lane.b32.xlu0 %v840, 64
    %v842 = vpop.permute.xlu0 %841
    %844 = vst.msk [vmem:[#allocation2 + $0x10] sm:$0x3] %vm362, %v842
    %v845 = vrot.slane %v832, 1
    %v846 = vsel %vm322, %v845, %v845
    %v847 = vsel %vm324, %v845, %v846
    %v848 = vsel %vm327, %v833, %v847
    %v849 = vsel %vm329, %v833, %v848
    %v850 = vsel %vm331, %v833, %v849
    %v851 = vsel %vm333, %v833, %v850
    %852 = vrot.lane.b32.xlu0 %v851, 96
    %v853 = vpop.permute.xlu0 %852
    %855 = vst.msk [vmem:[#allocation2 + $0x10] sm:$0x3] %vm374, %v853
    %v856 = vcombine.high %v248, %v248
    %v858 = vunpack.c.l.s4 1983009808
    %v859 = vunpack.c.0.s8 %v858
    %v860 = vlaneseq
    %v861 = vshrl.u32 %v860, 7
    %v862 = vsub.s32 %v859, %v861
    %v863 = vrot.slane %v856, %v862
    %v864 = vcombine.high %v288, %v288
    %v866 = vunpack.c.l.s4 1983009808
    %v867 = vunpack.c.0.s8 %v866
    %v868 = vlaneseq
    %v869 = vshrl.u32 %v868, 7
    %v870 = vsub.s32 %v867, %v869
    %v871 = vrot.slane %v864, %v870
    %v872 = vsel %vm322, %v863, %v863
    %v873 = vsel %vm324, %v863, %v872
    %v874 = vrot.slane %v871, 7
    %v875 = vsel %vm327, %v874, %v873
    %v876 = vsel %vm329, %v874, %v875
    %v877 = vsel %vm331, %v874, %v876
    %v878 = vsel %vm333, %v874, %v877
    %880 = vst.msk [vmem:[#allocation2 + $0x12] sm:$0x3] %vm336, %v878
    %v881 = vrot.slane %v863, 1
    %v882 = vsel %vm322, %v881, %v881
    %v883 = vsel %vm324, %v881, %v882
    %v884 = vsel %vm327, %v871, %v883
    %v885 = vsel %vm329, %v871, %v884
    %v886 = vsel %vm331, %v871, %v885
    %v887 = vsel %vm333, %v871, %v886
    %888 = vrot.lane.b32.xlu0 %v887, 32
    %v889 = vpop.permute.xlu0 %888
    %891 = vst.msk [vmem:[#allocation2 + $0x12] sm:$0x3] %vm348, %v889
    %v892 = vcombine.high %v863, %v863
    %v893 = vcombine.high %v871, %v871
    %v894 = vsel %vm322, %v892, %v892
    %v895 = vsel %vm324, %v892, %v894
    %v896 = vrot.slane %v893, 7
    %v897 = vsel %vm327, %v896, %v895
    %v898 = vsel %vm329, %v896, %v897
    %v899 = vsel %vm331, %v896, %v898
    %v900 = vsel %vm333, %v896, %v899
    %901 = vrot.lane.b32.xlu0 %v900, 64
    %v902 = vpop.permute.xlu0 %901
    %904 = vst.msk [vmem:[#allocation2 + $0x12] sm:$0x3] %vm362, %v902
    %v905 = vrot.slane %v892, 1
    %v906 = vsel %vm322, %v905, %v905
    %v907 = vsel %vm324, %v905, %v906
    %v908 = vsel %vm327, %v893, %v907
    %v909 = vsel %vm329, %v893, %v908
    %v910 = vsel %vm331, %v893, %v909
    %v911 = vsel %vm333, %v893, %v910
    %912 = vrot.lane.b32.xlu0 %v911, 96
    %v913 = vpop.permute.xlu0 %912
    %915 = vst.msk [vmem:[#allocation2 + $0x12] sm:$0x3] %vm374, %v913
    %v919 = vunpack.c.l.s4 1983009808
    %v920 = vunpack.c.0.s8 %v919
    %v921 = vlaneseq
    %v922 = vshrl.u32 %v921, 7
    %v923 = vsub.s32 %v920, %v922
    %v924 = vrot.slane %v253, %v923
    %v926 = vunpack.c.l.s4 1983009808
    %v927 = vunpack.c.0.s8 %v926
    %v928 = vlaneseq
    %v929 = vshrl.u32 %v928, 7
    %v930 = vsub.s32 %v927, %v929
    %v931 = vrot.slane %v293, %v930
    %v932 = vsel %vm322, %v924, %v924
    %v933 = vsel %vm324, %v924, %v932
    %v934 = vrot.slane %v931, 7
    %v935 = vsel %vm327, %v934, %v933
    %v936 = vsel %vm329, %v934, %v935
    %v937 = vsel %vm331, %v934, %v936
    %v938 = vsel %vm333, %v934, %v937
    %940 = vst.msk [vmem:[#allocation2 + $0x14] sm:$0x3] %vm336, %v938
    %v941 = vrot.slane %v924, 1
    %v942 = vsel %vm322, %v941, %v941
    %v943 = vsel %vm324, %v941, %v942
    %v944 = vsel %vm327, %v931, %v943
    %v945 = vsel %vm329, %v931, %v944
    %v946 = vsel %vm331, %v931, %v945
    %v947 = vsel %vm333, %v931, %v946
    %948 = vrot.lane.b32.xlu0 %v947, 32
    %v949 = vpop.permute.xlu0 %948
    %951 = vst.msk [vmem:[#allocation2 + $0x14] sm:$0x3] %vm348, %v949
    %v952 = vcombine.high %v924, %v924
    %v953 = vcombine.high %v931, %v931
    %v954 = vsel %vm322, %v952, %v952
    %v955 = vsel %vm324, %v952, %v954
    %v956 = vrot.slane %v953, 7
    %v957 = vsel %vm327, %v956, %v955
    %v958 = vsel %vm329, %v956, %v957
    %v959 = vsel %vm331, %v956, %v958
    %v960 = vsel %vm333, %v956, %v959
    %961 = vrot.lane.b32.xlu0 %v960, 64
    %v962 = vpop.permute.xlu0 %961
    %964 = vst.msk [vmem:[#allocation2 + $0x14] sm:$0x3] %vm362, %v962
    %v965 = vrot.slane %v952, 1
    %v966 = vsel %vm322, %v965, %v965
    %v967 = vsel %vm324, %v965, %v966
    %v968 = vsel %vm327, %v953, %v967
    %v969 = vsel %vm329, %v953, %v968
    %v970 = vsel %vm331, %v953, %v969
    %v971 = vsel %vm333, %v953, %v970
    %972 = vrot.lane.b32.xlu0 %v971, 96
    %v973 = vpop.permute.xlu0 %972
    %975 = vst.msk [vmem:[#allocation2 + $0x14] sm:$0x3] %vm374, %v973
    %v976 = vcombine.high %v253, %v253
    %v978 = vunpack.c.l.s4 1983009808
    %v979 = vunpack.c.0.s8 %v978
    %v980 = vlaneseq
    %v981 = vshrl.u32 %v980, 7
    %v982 = vsub.s32 %v979, %v981
    %v983 = vrot.slane %v976, %v982
    %v984 = vcombine.high %v293, %v293
    %v986 = vunpack.c.l.s4 1983009808
    %v987 = vunpack.c.0.s8 %v986
    %v988 = vlaneseq
    %v989 = vshrl.u32 %v988, 7
    %v990 = vsub.s32 %v987, %v989
    %v991 = vrot.slane %v984, %v990
    %v992 = vsel %vm322, %v983, %v983
    %v993 = vsel %vm324, %v983, %v992
    %v994 = vrot.slane %v991, 7
    %v995 = vsel %vm327, %v994, %v993
    %v996 = vsel %vm329, %v994, %v995
    %v997 = vsel %vm331, %v994, %v996
    %v998 = vsel %vm333, %v994, %v997
    %1000 = vst.msk [vmem:[#allocation2 + $0x16] sm:$0x3] %vm336, %v998
    %v1001 = vrot.slane %v983, 1
    %v1002 = vsel %vm322, %v1001, %v1001
    %v1003 = vsel %vm324, %v1001, %v1002
    %v1004 = vsel %vm327, %v991, %v1003
    %v1005 = vsel %vm329, %v991, %v1004
    %v1006 = vsel %vm331, %v991, %v1005
    %v1007 = vsel %vm333, %v991, %v1006
    %1008 = vrot.lane.b32.xlu0 %v1007, 32
    %v1009 = vpop.permute.xlu0 %1008
    %1011 = vst.msk [vmem:[#allocation2 + $0x16] sm:$0x3] %vm348, %v1009
    %v1012 = vcombine.high %v983, %v983
    %v1013 = vcombine.high %v991, %v991
    %v1014 = vsel %vm322, %v1012, %v1012
    %v1015 = vsel %vm324, %v1012, %v1014
    %v1016 = vrot.slane %v1013, 7
    %v1017 = vsel %vm327, %v1016, %v1015
    %v1018 = vsel %vm329, %v1016, %v1017
    %v1019 = vsel %vm331, %v1016, %v1018
    %v1020 = vsel %vm333, %v1016, %v1019
    %1021 = vrot.lane.b32.xlu0 %v1020, 64
    %v1022 = vpop.permute.xlu0 %1021
    %1024 = vst.msk [vmem:[#allocation2 + $0x16] sm:$0x3] %vm362, %v1022
    %v1025 = vrot.slane %v1012, 1
    %v1026 = vsel %vm322, %v1025, %v1025
    %v1027 = vsel %vm324, %v1025, %v1026
    %v1028 = vsel %vm327, %v1013, %v1027
    %v1029 = vsel %vm329, %v1013, %v1028
    %v1030 = vsel %vm331, %v1013, %v1029
    %v1031 = vsel %vm333, %v1013, %v1030
    %1032 = vrot.lane.b32.xlu0 %v1031, 96
    %v1033 = vpop.permute.xlu0 %1032
    %1035 = vst.msk [vmem:[#allocation2 + $0x16] sm:$0x3] %vm374, %v1033
    %v1039 = vunpack.c.l.s4 1983009808
    %v1040 = vunpack.c.0.s8 %v1039
    %v1041 = vlaneseq
    %v1042 = vshrl.u32 %v1041, 7
    %v1043 = vsub.s32 %v1040, %v1042
    %v1044 = vrot.slane %v258, %v1043
    %v1046 = vunpack.c.l.s4 1983009808
    %v1047 = vunpack.c.0.s8 %v1046
    %v1048 = vlaneseq
    %v1049 = vshrl.u32 %v1048, 7
    %v1050 = vsub.s32 %v1047, %v1049
    %v1051 = vrot.slane %v298, %v1050
    %v1052 = vsel %vm322, %v1044, %v1044
    %v1053 = vsel %vm324, %v1044, %v1052
    %v1054 = vrot.slane %v1051, 7
    %v1055 = vsel %vm327, %v1054, %v1053
    %v1056 = vsel %vm329, %v1054, %v1055
    %v1057 = vsel %vm331, %v1054, %v1056
    %v1058 = vsel %vm333, %v1054, %v1057
    %1060 = vst.msk [vmem:[#allocation2 + $0x18] sm:$0x3] %vm336, %v1058
    %v1061 = vrot.slane %v1044, 1
    %v1062 = vsel %vm322, %v1061, %v1061
    %v1063 = vsel %vm324, %v1061, %v1062
    %v1064 = vsel %vm327, %v1051, %v1063
    %v1065 = vsel %vm329, %v1051, %v1064
    %v1066 = vsel %vm331, %v1051, %v1065
    %v1067 = vsel %vm333, %v1051, %v1066
    %1068 = vrot.lane.b32.xlu0 %v1067, 32
    %v1069 = vpop.permute.xlu0 %1068
    %1071 = vst.msk [vmem:[#allocation2 + $0x18] sm:$0x3] %vm348, %v1069
    %v1072 = vcombine.high %v1044, %v1044
    %v1073 = vcombine.high %v1051, %v1051
    %v1074 = vsel %vm322, %v1072, %v1072
    %v1075 = vsel %vm324, %v1072, %v1074
    %v1076 = vrot.slane %v1073, 7
    %v1077 = vsel %vm327, %v1076, %v1075
    %v1078 = vsel %vm329, %v1076, %v1077
    %v1079 = vsel %vm331, %v1076, %v1078
    %v1080 = vsel %vm333, %v1076, %v1079
    %1081 = vrot.lane.b32.xlu0 %v1080, 64
    %v1082 = vpop.permute.xlu0 %1081
    %1084 = vst.msk [vmem:[#allocation2 + $0x18] sm:$0x3] %vm362, %v1082
    %v1085 = vrot.slane %v1072, 1
    %v1086 = vsel %vm322, %v1085, %v1085
    %v1087 = vsel %vm324, %v1085, %v1086
    %v1088 = vsel %vm327, %v1073, %v1087
    %v1089 = vsel %vm329, %v1073, %v1088
    %v1090 = vsel %vm331, %v1073, %v1089
    %v1091 = vsel %vm333, %v1073, %v1090
    %1092 = vrot.lane.b32.xlu0 %v1091, 96
    %v1093 = vpop.permute.xlu0 %1092
    %1095 = vst.msk [vmem:[#allocation2 + $0x18] sm:$0x3] %vm374, %v1093
    %v1096 = vcombine.high %v258, %v258
    %v1098 = vunpack.c.l.s4 1983009808
    %v1099 = vunpack.c.0.s8 %v1098
    %v1100 = vlaneseq
    %v1101 = vshrl.u32 %v1100, 7
    %v1102 = vsub.s32 %v1099, %v1101
    %v1103 = vrot.slane %v1096, %v1102
    %v1104 = vcombine.high %v298, %v298
    %v1106 = vunpack.c.l.s4 1983009808
    %v1107 = vunpack.c.0.s8 %v1106
    %v1108 = vlaneseq
    %v1109 = vshrl.u32 %v1108, 7
    %v1110 = vsub.s32 %v1107, %v1109
    %v1111 = vrot.slane %v1104, %v1110
    %v1112 = vsel %vm322, %v1103, %v1103
    %v1113 = vsel %vm324, %v1103, %v1112
    %v1114 = vrot.slane %v1111, 7
    %v1115 = vsel %vm327, %v1114, %v1113
    %v1116 = vsel %vm329, %v1114, %v1115
    %v1117 = vsel %vm331, %v1114, %v1116
    %v1118 = vsel %vm333, %v1114, %v1117
    %1120 = vst.msk [vmem:[#allocation2 + $0x1a] sm:$0x3] %vm336, %v1118
    %v1121 = vrot.slane %v1103, 1
    %v1122 = vsel %vm322, %v1121, %v1121
    %v1123 = vsel %vm324, %v1121, %v1122
    %v1124 = vsel %vm327, %v1111, %v1123
    %v1125 = vsel %vm329, %v1111, %v1124
    %v1126 = vsel %vm331, %v1111, %v1125
    %v1127 = vsel %vm333, %v1111, %v1126
    %1128 = vrot.lane.b32.xlu0 %v1127, 32
    %v1129 = vpop.permute.xlu0 %1128
    %1131 = vst.msk [vmem:[#allocation2 + $0x1a] sm:$0x3] %vm348, %v1129
    %v1132 = vcombine.high %v1103, %v1103
    %v1133 = vcombine.high %v1111, %v1111
    %v1134 = vsel %vm322, %v1132, %v1132
    %v1135 = vsel %vm324, %v1132, %v1134
    %v1136 = vrot.slane %v1133, 7
    %v1137 = vsel %vm327, %v1136, %v1135
    %v1138 = vsel %vm329, %v1136, %v1137
    %v1139 = vsel %vm331, %v1136, %v1138
    %v1140 = vsel %vm333, %v1136, %v1139
    %1141 = vrot.lane.b32.xlu0 %v1140, 64
    %v1142 = vpop.permute.xlu0 %1141
    %1144 = vst.msk [vmem:[#allocation2 + $0x1a] sm:$0x3] %vm362, %v1142
    %v1145 = vrot.slane %v1132, 1
    %v1146 = vsel %vm322, %v1145, %v1145
    %v1147 = vsel %vm324, %v1145, %v1146
    %v1148 = vsel %vm327, %v1133, %v1147
    %v1149 = vsel %vm329, %v1133, %v1148
    %v1150 = vsel %vm331, %v1133, %v1149
    %v1151 = vsel %vm333, %v1133, %v1150
    %1152 = vrot.lane.b32.xlu0 %v1151, 96
    %v1153 = vpop.permute.xlu0 %1152
    %1155 = vst.msk [vmem:[#allocation2 + $0x1a] sm:$0x3] %vm374, %v1153
    %v1159 = vunpack.c.l.s4 1983009808
    %v1160 = vunpack.c.0.s8 %v1159
    %v1161 = vlaneseq
    %v1162 = vshrl.u32 %v1161, 7
    %v1163 = vsub.s32 %v1160, %v1162
    %v1164 = vrot.slane %v263, %v1163
    %v1166 = vunpack.c.l.s4 1983009808
    %v1167 = vunpack.c.0.s8 %v1166
    %v1168 = vlaneseq
    %v1169 = vshrl.u32 %v1168, 7
    %v1170 = vsub.s32 %v1167, %v1169
    %v1171 = vrot.slane %v303, %v1170
    %v1172 = vsel %vm322, %v1164, %v1164
    %v1173 = vsel %vm324, %v1164, %v1172
    %v1174 = vrot.slane %v1171, 7
    %v1175 = vsel %vm327, %v1174, %v1173
    %v1176 = vsel %vm329, %v1174, %v1175
    %v1177 = vsel %vm331, %v1174, %v1176
    %v1178 = vsel %vm333, %v1174, %v1177
    %1180 = vst.msk [vmem:[#allocation2 + $0x1c] sm:$0x3] %vm336, %v1178
    %v1181 = vrot.slane %v1164, 1
    %v1182 = vsel %vm322, %v1181, %v1181
    %v1183 = vsel %vm324, %v1181, %v1182
    %v1184 = vsel %vm327, %v1171, %v1183
    %v1185 = vsel %vm329, %v1171, %v1184
    %v1186 = vsel %vm331, %v1171, %v1185
    %v1187 = vsel %vm333, %v1171, %v1186
    %1188 = vrot.lane.b32.xlu0 %v1187, 32
    %v1189 = vpop.permute.xlu0 %1188
    %1191 = vst.msk [vmem:[#allocation2 + $0x1c] sm:$0x3] %vm348, %v1189
    %v1192 = vcombine.high %v1164, %v1164
    %v1193 = vcombine.high %v1171, %v1171
    %v1194 = vsel %vm322, %v1192, %v1192
    %v1195 = vsel %vm324, %v1192, %v1194
    %v1196 = vrot.slane %v1193, 7
    %v1197 = vsel %vm327, %v1196, %v1195
    %v1198 = vsel %vm329, %v1196, %v1197
    %v1199 = vsel %vm331, %v1196, %v1198
    %v1200 = vsel %vm333, %v1196, %v1199
    %1201 = vrot.lane.b32.xlu0 %v1200, 64
    %v1202 = vpop.permute.xlu0 %1201
    %1204 = vst.msk [vmem:[#allocation2 + $0x1c] sm:$0x3] %vm362, %v1202
    %v1205 = vrot.slane %v1192, 1
    %v1206 = vsel %vm322, %v1205, %v1205
    %v1207 = vsel %vm324, %v1205, %v1206
    %v1208 = vsel %vm327, %v1193, %v1207
    %v1209 = vsel %vm329, %v1193, %v1208
    %v1210 = vsel %vm331, %v1193, %v1209
    %v1211 = vsel %vm333, %v1193, %v1210
    %1212 = vrot.lane.b32.xlu0 %v1211, 96
    %v1213 = vpop.permute.xlu0 %1212
    %1215 = vst.msk [vmem:[#allocation2 + $0x1c] sm:$0x3] %vm374, %v1213
    %v1216 = vcombine.high %v263, %v263
    %v1218 = vunpack.c.l.s4 1983009808
    %v1219 = vunpack.c.0.s8 %v1218
    %v1220 = vlaneseq
    %v1221 = vshrl.u32 %v1220, 7
    %v1222 = vsub.s32 %v1219, %v1221
    %v1223 = vrot.slane %v1216, %v1222
    %v1224 = vcombine.high %v303, %v303
    %v1226 = vunpack.c.l.s4 1983009808
    %v1227 = vunpack.c.0.s8 %v1226
    %v1228 = vlaneseq
    %v1229 = vshrl.u32 %v1228, 7
    %v1230 = vsub.s32 %v1227, %v1229
    %v1231 = vrot.slane %v1224, %v1230
    %v1232 = vsel %vm322, %v1223, %v1223
    %v1233 = vsel %vm324, %v1223, %v1232
    %v1234 = vrot.slane %v1231, 7
    %v1235 = vsel %vm327, %v1234, %v1233
    %v1236 = vsel %vm329, %v1234, %v1235
    %v1237 = vsel %vm331, %v1234, %v1236
    %v1238 = vsel %vm333, %v1234, %v1237
    %1240 = vst.msk [vmem:[#allocation2 + $0x1e] sm:$0x3] %vm336, %v1238
    %v1241 = vrot.slane %v1223, 1
    %v1242 = vsel %vm322, %v1241, %v1241
    %v1243 = vsel %vm324, %v1241, %v1242
    %v1244 = vsel %vm327, %v1231, %v1243
    %v1245 = vsel %vm329, %v1231, %v1244
    %v1246 = vsel %vm331, %v1231, %v1245
    %v1247 = vsel %vm333, %v1231, %v1246
    %1248 = vrot.lane.b32.xlu0 %v1247, 32
    %v1249 = vpop.permute.xlu0 %1248
    %1251 = vst.msk [vmem:[#allocation2 + $0x1e] sm:$0x3] %vm348, %v1249
    %v1252 = vcombine.high %v1223, %v1223
    %v1253 = vcombine.high %v1231, %v1231
    %v1254 = vsel %vm322, %v1252, %v1252
    %v1255 = vsel %vm324, %v1252, %v1254
    %v1256 = vrot.slane %v1253, 7
    %v1257 = vsel %vm327, %v1256, %v1255
    %v1258 = vsel %vm329, %v1256, %v1257
    %v1259 = vsel %vm331, %v1256, %v1258
    %v1260 = vsel %vm333, %v1256, %v1259
    %1261 = vrot.lane.b32.xlu0 %v1260, 64
    %v1262 = vpop.permute.xlu0 %1261
    %1264 = vst.msk [vmem:[#allocation2 + $0x1e] sm:$0x3] %vm362, %v1262
    %v1265 = vrot.slane %v1252, 1
    %v1266 = vsel %vm322, %v1265, %v1265
    %v1267 = vsel %vm324, %v1265, %v1266
    %v1268 = vsel %vm327, %v1253, %v1267
    %v1269 = vsel %vm329, %v1253, %v1268
    %v1270 = vsel %vm331, %v1253, %v1269
    %v1271 = vsel %vm333, %v1253, %v1270
    %1272 = vrot.lane.b32.xlu0 %v1271, 96
    %v1273 = vpop.permute.xlu0 %1272
    %1275 = vst.msk [vmem:[#allocation2 + $0x1e] sm:$0x3] %vm374, %v1273
    %v1276 = vld [vmem:[#allocation2] sm:$0xff]
    %v1277 = vld [vmem:[#allocation2 + $0x8] sm:$0xff]
    %v1278 = vld [vmem:[#allocation2 + $0x10] sm:$0xff]
    %v1279 = vld [vmem:[#allocation2 + $0x18] sm:$0xff]
    %v1280 = vld [vmem:[#allocation8] sm:$0xff]
    %v1281 = vld [vmem:[#allocation8 + $0x8] sm:$0xff]
    %v1282 = vld [vmem:[#allocation8 + $0x10] sm:$0xff]
    %v1283 = vld [vmem:[#allocation8 + $0x18] sm:$0xff]
    %v1284 = vld [vmem:[#allocation8 + $0x20] sm:$0xff]
    %v1285 = vld [vmem:[#allocation8 + $0x28] sm:$0xff]
    %v1286 = vld [vmem:[#allocation8 + $0x30] sm:$0xff]
    %v1287 = vld [vmem:[#allocation8 + $0x38] sm:$0xff]
    %v1288 = vld [vmem:[#allocation8 + $0x40] sm:$0xff]
    %v1289 = vld [vmem:[#allocation8 + $0x48] sm:$0xff]
    %v1290 = vld [vmem:[#allocation8 + $0x50] sm:$0xff]
    %v1291 = vld [vmem:[#allocation8 + $0x58] sm:$0xff]
    %v1292 = vld [vmem:[#allocation8 + $0x60] sm:$0xff]
    %v1293 = vld [vmem:[#allocation8 + $0x68] sm:$0xff]
    %v1294 = vld [vmem:[#allocation8 + $0x70] sm:$0xff]
    %v1295 = vld [vmem:[#allocation8 + $0x78] sm:$0xff]
    %v1296 = vld [vmem:[#allocation8 + $0x80] sm:$0xff]
    %v1297 = vld [vmem:[#allocation8 + $0x88] sm:$0xff]
    %v1298 = vld [vmem:[#allocation8 + $0x90] sm:$0xff]
    %v1299 = vld [vmem:[#allocation8 + $0x98] sm:$0xff]
    %v1300 = vld [vmem:[#allocation8 + $0xa0] sm:$0xff]
    %v1301 = vld [vmem:[#allocation8 + $0xa8] sm:$0xff]
    %v1302 = vld [vmem:[#allocation8 + $0xb0] sm:$0xff]
    %v1303 = vld [vmem:[#allocation8 + $0xb8] sm:$0xff]
    %v1304 = vld [vmem:[#allocation8 + $0xc0] sm:$0xff]
    %v1305 = vld [vmem:[#allocation8 + $0xc8] sm:$0xff]
    %v1306 = vld [vmem:[#allocation8 + $0xd0] sm:$0xff]
    %v1307 = vld [vmem:[#allocation8 + $0xd8] sm:$0xff]
    %v1308 = vld [vmem:[#allocation8 + $0xe0] sm:$0xff]
    %v1309 = vld [vmem:[#allocation8 + $0xe8] sm:$0xff]
    %v1310 = vld [vmem:[#allocation8 + $0xf0] sm:$0xff]
    %v1311 = vld [vmem:[#allocation8 + $0xf8] sm:$0xff]
    %v1312 = vld [vmem:[#allocation8 + $0x100] sm:$0xff]
    %v1313 = vld [vmem:[#allocation8 + $0x108] sm:$0xff]
    %v1314 = vld [vmem:[#allocation8 + $0x110] sm:$0xff]
    %v1315 = vld [vmem:[#allocation8 + $0x118] sm:$0xff]
    %v1316 = vld [vmem:[#allocation8 + $0x120] sm:$0xff]
    %v1317 = vld [vmem:[#allocation8 + $0x128] sm:$0xff]
    %v1318 = vld [vmem:[#allocation8 + $0x130] sm:$0xff]
    %v1319 = vld [vmem:[#allocation8 + $0x138] sm:$0xff]
    %v1320 = vld [vmem:[#allocation8 + $0x140] sm:$0xff]
    %v1321 = vld [vmem:[#allocation8 + $0x148] sm:$0xff]
    %v1322 = vld [vmem:[#allocation8 + $0x150] sm:$0xff]
    %v1323 = vld [vmem:[#allocation8 + $0x158] sm:$0xff]
    %v1324 = vld [vmem:[#allocation8 + $0x160] sm:$0xff]
    %v1325 = vld [vmem:[#allocation8 + $0x168] sm:$0xff]
    %v1326 = vld [vmem:[#allocation8 + $0x170] sm:$0xff]
    %v1327 = vld [vmem:[#allocation8 + $0x178] sm:$0xff]
    %v1328 = vld [vmem:[#allocation8 + $0x180] sm:$0xff]
    %v1329 = vld [vmem:[#allocation8 + $0x188] sm:$0xff]
    %v1330 = vld [vmem:[#allocation8 + $0x190] sm:$0xff]
    %v1331 = vld [vmem:[#allocation8 + $0x198] sm:$0xff]
    %v1332 = vld [vmem:[#allocation8 + $0x1a0] sm:$0xff]
    %v1333 = vld [vmem:[#allocation8 + $0x1a8] sm:$0xff]
    %v1334 = vld [vmem:[#allocation8 + $0x1b0] sm:$0xff]
    %v1335 = vld [vmem:[#allocation8 + $0x1b8] sm:$0xff]
    %v1336 = vld [vmem:[#allocation8 + $0x1c0] sm:$0xff]
    %v1337 = vld [vmem:[#allocation8 + $0x1c8] sm:$0xff]
    %v1338 = vld [vmem:[#allocation8 + $0x1d0] sm:$0xff]
    %v1339 = vld [vmem:[#allocation8 + $0x1d8] sm:$0xff]
    %v1340 = vld [vmem:[#allocation8 + $0x1e0] sm:$0xff]
    %v1341 = vld [vmem:[#allocation8 + $0x1e8] sm:$0xff]
    %v1342 = vld [vmem:[#allocation8 + $0x1f0] sm:$0xff]
    %v1343 = vld [vmem:[#allocation8 + $0x1f8] sm:$0xff]
    %v1344 = vld [vmem:[#allocation8 + $0x200] sm:$0xff]
    %v1345 = vld [vmem:[#allocation8 + $0x208] sm:$0xff]
    %v1346 = vld [vmem:[#allocation8 + $0x210] sm:$0xff]
    %v1347 = vld [vmem:[#allocation8 + $0x218] sm:$0xff]
    %v1348 = vld [vmem:[#allocation8 + $0x220] sm:$0xff]
    %v1349 = vld [vmem:[#allocation8 + $0x228] sm:$0xff]
    %v1350 = vld [vmem:[#allocation8 + $0x230] sm:$0xff]
    %v1351 = vld [vmem:[#allocation8 + $0x238] sm:$0xff]
    %v1352 = vld [vmem:[#allocation8 + $0x240] sm:$0xff]
    %v1353 = vld [vmem:[#allocation8 + $0x248] sm:$0xff]
    %v1354 = vld [vmem:[#allocation8 + $0x250] sm:$0xff]
    %v1355 = vld [vmem:[#allocation8 + $0x258] sm:$0xff]
    %v1356 = vld [vmem:[#allocation8 + $0x260] sm:$0xff]
    %v1357 = vld [vmem:[#allocation8 + $0x268] sm:$0xff]
    %v1358 = vld [vmem:[#allocation8 + $0x270] sm:$0xff]
    %v1359 = vld [vmem:[#allocation8 + $0x278] sm:$0xff]
    %v1360 = vld [vmem:[#allocation8 + $0x280] sm:$0xff]
    %v1361 = vld [vmem:[#allocation8 + $0x288] sm:$0xff]
    %v1362 = vld [vmem:[#allocation8 + $0x290] sm:$0xff]
    %v1363 = vld [vmem:[#allocation8 + $0x298] sm:$0xff]
    %v1364 = vld [vmem:[#allocation8 + $0x2a0] sm:$0xff]
    %v1365 = vld [vmem:[#allocation8 + $0x2a8] sm:$0xff]
    %v1366 = vld [vmem:[#allocation8 + $0x2b0] sm:$0xff]
    %v1367 = vld [vmem:[#allocation8 + $0x2b8] sm:$0xff]
    %v1368 = vld [vmem:[#allocation8 + $0x2c0] sm:$0xff]
    %v1369 = vld [vmem:[#allocation8 + $0x2c8] sm:$0xff]
    %v1370 = vld [vmem:[#allocation8 + $0x2d0] sm:$0xff]
    %v1371 = vld [vmem:[#allocation8 + $0x2d8] sm:$0xff]
    %v1372 = vld [vmem:[#allocation8 + $0x2e0] sm:$0xff]
    %v1373 = vld [vmem:[#allocation8 + $0x2e8] sm:$0xff]
    %v1374 = vld [vmem:[#allocation8 + $0x2f0] sm:$0xff]
    %v1375 = vld [vmem:[#allocation8 + $0x2f8] sm:$0xff]
    %v1376 = vld [vmem:[#allocation8 + $0x300] sm:$0xff]
    %v1377 = vld [vmem:[#allocation8 + $0x308] sm:$0xff]
    %v1378 = vld [vmem:[#allocation8 + $0x310] sm:$0xff]
    %v1379 = vld [vmem:[#allocation8 + $0x318] sm:$0xff]
    %v1380 = vld [vmem:[#allocation8 + $0x320] sm:$0xff]
    %v1381 = vld [vmem:[#allocation8 + $0x328] sm:$0xff]
    %v1382 = vld [vmem:[#allocation8 + $0x330] sm:$0xff]
    %v1383 = vld [vmem:[#allocation8 + $0x338] sm:$0xff]
    %v1384 = vld [vmem:[#allocation8 + $0x340] sm:$0xff]
    %v1385 = vld [vmem:[#allocation8 + $0x348] sm:$0xff]
    %v1386 = vld [vmem:[#allocation8 + $0x350] sm:$0xff]
    %v1387 = vld [vmem:[#allocation8 + $0x358] sm:$0xff]
    %v1388 = vld [vmem:[#allocation8 + $0x360] sm:$0xff]
    %v1389 = vld [vmem:[#allocation8 + $0x368] sm:$0xff]
    %v1390 = vld [vmem:[#allocation8 + $0x370] sm:$0xff]
    %v1391 = vld [vmem:[#allocation8 + $0x378] sm:$0xff]
    %v1392 = vld [vmem:[#allocation8 + $0x380] sm:$0xff]
    %v1393 = vld [vmem:[#allocation8 + $0x388] sm:$0xff]
    %v1394 = vld [vmem:[#allocation8 + $0x390] sm:$0xff]
    %v1395 = vld [vmem:[#allocation8 + $0x398] sm:$0xff]
    %v1396 = vld [vmem:[#allocation8 + $0x3a0] sm:$0xff]
    %v1397 = vld [vmem:[#allocation8 + $0x3a8] sm:$0xff]
    %v1398 = vld [vmem:[#allocation8 + $0x3b0] sm:$0xff]
    %v1399 = vld [vmem:[#allocation8 + $0x3b8] sm:$0xff]
    %v1400 = vld [vmem:[#allocation8 + $0x3c0] sm:$0xff]
    %v1401 = vld [vmem:[#allocation8 + $0x3c8] sm:$0xff]
    %v1402 = vld [vmem:[#allocation8 + $0x3d0] sm:$0xff]
    %v1403 = vld [vmem:[#allocation8 + $0x3d8] sm:$0xff]
    %v1404 = vld [vmem:[#allocation8 + $0x3e0] sm:$0xff]
    %v1405 = vld [vmem:[#allocation8 + $0x3e8] sm:$0xff]
    %v1406 = vld [vmem:[#allocation8 + $0x3f0] sm:$0xff]
    %v1407 = vld [vmem:[#allocation8 + $0x3f8] sm:$0xff]
    %v1408 = vld [vmem:[#allocation8 + $0x400] sm:$0xff]
    %v1409 = vld [vmem:[#allocation8 + $0x408] sm:$0xff]
    %v1410 = vld [vmem:[#allocation8 + $0x410] sm:$0xff]
    %v1411 = vld [vmem:[#allocation8 + $0x418] sm:$0xff]
    %v1412 = vld [vmem:[#allocation8 + $0x420] sm:$0xff]
    %v1413 = vld [vmem:[#allocation8 + $0x428] sm:$0xff]
    %v1414 = vld [vmem:[#allocation8 + $0x430] sm:$0xff]
    %v1415 = vld [vmem:[#allocation8 + $0x438] sm:$0xff]
    %v1416 = vld [vmem:[#allocation8 + $0x440] sm:$0xff]
    %v1417 = vld [vmem:[#allocation8 + $0x448] sm:$0xff]
    %v1418 = vld [vmem:[#allocation8 + $0x450] sm:$0xff]
    %v1419 = vld [vmem:[#allocation8 + $0x458] sm:$0xff]
    %v1420 = vld [vmem:[#allocation8 + $0x460] sm:$0xff]
    %v1421 = vld [vmem:[#allocation8 + $0x468] sm:$0xff]
    %v1422 = vld [vmem:[#allocation8 + $0x470] sm:$0xff]
    %v1423 = vld [vmem:[#allocation8 + $0x478] sm:$0xff]
    %v1424 = vld [vmem:[#allocation8 + $0x480] sm:$0xff]
    %v1425 = vld [vmem:[#allocation8 + $0x488] sm:$0xff]
    %v1426 = vld [vmem:[#allocation8 + $0x490] sm:$0xff]
    %v1427 = vld [vmem:[#allocation8 + $0x498] sm:$0xff]
    %v1428 = vld [vmem:[#allocation8 + $0x4a0] sm:$0xff]
    %v1429 = vld [vmem:[#allocation8 + $0x4a8] sm:$0xff]
    %v1430 = vld [vmem:[#allocation8 + $0x4b0] sm:$0xff]
    %v1431 = vld [vmem:[#allocation8 + $0x4b8] sm:$0xff]
    %v1432 = vld [vmem:[#allocation8 + $0x4c0] sm:$0xff]
    %v1433 = vld [vmem:[#allocation8 + $0x4c8] sm:$0xff]
    %v1434 = vld [vmem:[#allocation8 + $0x4d0] sm:$0xff]
    %v1435 = vld [vmem:[#allocation8 + $0x4d8] sm:$0xff]
    %v1436 = vld [vmem:[#allocation8 + $0x4e0] sm:$0xff]
    %v1437 = vld [vmem:[#allocation8 + $0x4e8] sm:$0xff]
    %v1438 = vld [vmem:[#allocation8 + $0x4f0] sm:$0xff]
    %v1439 = vld [vmem:[#allocation8 + $0x4f8] sm:$0xff]
    %v1440 = vld [vmem:[#allocation8 + $0x500] sm:$0xff]
    %v1441 = vld [vmem:[#allocation8 + $0x508] sm:$0xff]
    %v1442 = vld [vmem:[#allocation8 + $0x510] sm:$0xff]
    %v1443 = vld [vmem:[#allocation8 + $0x518] sm:$0xff]
    %v1444 = vld [vmem:[#allocation8 + $0x520] sm:$0xff]
    %v1445 = vld [vmem:[#allocation8 + $0x528] sm:$0xff]
    %v1446 = vld [vmem:[#allocation8 + $0x530] sm:$0xff]
    %v1447 = vld [vmem:[#allocation8 + $0x538] sm:$0xff]
    %v1448 = vld [vmem:[#allocation8 + $0x540] sm:$0xff]
    %v1449 = vld [vmem:[#allocation8 + $0x548] sm:$0xff]
    %v1450 = vld [vmem:[#allocation8 + $0x550] sm:$0xff]
    %v1451 = vld [vmem:[#allocation8 + $0x558] sm:$0xff]
    %v1452 = vld [vmem:[#allocation8 + $0x560] sm:$0xff]
    %v1453 = vld [vmem:[#allocation8 + $0x568] sm:$0xff]
    %v1454 = vld [vmem:[#allocation8 + $0x570] sm:$0xff]
    %v1455 = vld [vmem:[#allocation8 + $0x578] sm:$0xff]
    %v1456 = vld [vmem:[#allocation8 + $0x580] sm:$0xff]
    %v1457 = vld [vmem:[#allocation8 + $0x588] sm:$0xff]
    %v1458 = vld [vmem:[#allocation8 + $0x590] sm:$0xff]
    %v1459 = vld [vmem:[#allocation8 + $0x598] sm:$0xff]
    %v1460 = vld [vmem:[#allocation8 + $0x5a0] sm:$0xff]
    %v1461 = vld [vmem:[#allocation8 + $0x5a8] sm:$0xff]
    %v1462 = vld [vmem:[#allocation8 + $0x5b0] sm:$0xff]
    %v1463 = vld [vmem:[#allocation8 + $0x5b8] sm:$0xff]
    %v1464 = vld [vmem:[#allocation8 + $0x5c0] sm:$0xff]
    %v1465 = vld [vmem:[#allocation8 + $0x5c8] sm:$0xff]
    %v1466 = vld [vmem:[#allocation8 + $0x5d0] sm:$0xff]
    %v1467 = vld [vmem:[#allocation8 + $0x5d8] sm:$0xff]
    %v1468 = vld [vmem:[#allocation8 + $0x5e0] sm:$0xff]
    %v1469 = vld [vmem:[#allocation8 + $0x5e8] sm:$0xff]
    %v1470 = vld [vmem:[#allocation8 + $0x5f0] sm:$0xff]
    %v1471 = vld [vmem:[#allocation8 + $0x5f8] sm:$0xff]
    %v1472 = vld [vmem:[#allocation8 + $0x600] sm:$0xff]
    %v1473 = vld [vmem:[#allocation8 + $0x608] sm:$0xff]
    %v1474 = vld [vmem:[#allocation8 + $0x610] sm:$0xff]
    %v1475 = vld [vmem:[#allocation8 + $0x618] sm:$0xff]
    %v1476 = vld [vmem:[#allocation8 + $0x620] sm:$0xff]
    %v1477 = vld [vmem:[#allocation8 + $0x628] sm:$0xff]
    %v1478 = vld [vmem:[#allocation8 + $0x630] sm:$0xff]
    %v1479 = vld [vmem:[#allocation8 + $0x638] sm:$0xff]
    %v1480 = vld [vmem:[#allocation8 + $0x640] sm:$0xff]
    %v1481 = vld [vmem:[#allocation8 + $0x648] sm:$0xff]
    %v1482 = vld [vmem:[#allocation8 + $0x650] sm:$0xff]
    %v1483 = vld [vmem:[#allocation8 + $0x658] sm:$0xff]
    %v1484 = vld [vmem:[#allocation8 + $0x660] sm:$0xff]
    %v1485 = vld [vmem:[#allocation8 + $0x668] sm:$0xff]
    %v1486 = vld [vmem:[#allocation8 + $0x670] sm:$0xff]
    %v1487 = vld [vmem:[#allocation8 + $0x678] sm:$0xff]
    %v1488 = vld [vmem:[#allocation8 + $0x680] sm:$0xff]
    %v1489 = vld [vmem:[#allocation8 + $0x688] sm:$0xff]
    %v1490 = vld [vmem:[#allocation8 + $0x690] sm:$0xff]
    %v1491 = vld [vmem:[#allocation8 + $0x698] sm:$0xff]
    %v1492 = vld [vmem:[#allocation8 + $0x6a0] sm:$0xff]
    %v1493 = vld [vmem:[#allocation8 + $0x6a8] sm:$0xff]
    %v1494 = vld [vmem:[#allocation8 + $0x6b0] sm:$0xff]
    %v1495 = vld [vmem:[#allocation8 + $0x6b8] sm:$0xff]
    %v1496 = vld [vmem:[#allocation8 + $0x6c0] sm:$0xff]
    %v1497 = vld [vmem:[#allocation8 + $0x6c8] sm:$0xff]
    %v1498 = vld [vmem:[#allocation8 + $0x6d0] sm:$0xff]
    %v1499 = vld [vmem:[#allocation8 + $0x6d8] sm:$0xff]
    %v1500 = vld [vmem:[#allocation8 + $0x6e0] sm:$0xff]
    %v1501 = vld [vmem:[#allocation8 + $0x6e8] sm:$0xff]
    %v1502 = vld [vmem:[#allocation8 + $0x6f0] sm:$0xff]
    %v1503 = vld [vmem:[#allocation8 + $0x6f8] sm:$0xff]
    %v1504 = vld [vmem:[#allocation8 + $0x700] sm:$0xff]
    %v1505 = vld [vmem:[#allocation8 + $0x708] sm:$0xff]
    %v1506 = vld [vmem:[#allocation8 + $0x710] sm:$0xff]
    %v1507 = vld [vmem:[#allocation8 + $0x718] sm:$0xff]
    %v1508 = vld [vmem:[#allocation8 + $0x720] sm:$0xff]
    %v1509 = vld [vmem:[#allocation8 + $0x728] sm:$0xff]
    %v1510 = vld [vmem:[#allocation8 + $0x730] sm:$0xff]
    %v1511 = vld [vmem:[#allocation8 + $0x738] sm:$0xff]
    %v1512 = vld [vmem:[#allocation8 + $0x740] sm:$0xff]
    %v1513 = vld [vmem:[#allocation8 + $0x748] sm:$0xff]
    %v1514 = vld [vmem:[#allocation8 + $0x750] sm:$0xff]
    %v1515 = vld [vmem:[#allocation8 + $0x758] sm:$0xff]
    %v1516 = vld [vmem:[#allocation8 + $0x760] sm:$0xff]
    %v1517 = vld [vmem:[#allocation8 + $0x768] sm:$0xff]
    %v1518 = vld [vmem:[#allocation8 + $0x770] sm:$0xff]
    %v1519 = vld [vmem:[#allocation8 + $0x778] sm:$0xff]
    %v1520 = vld [vmem:[#allocation8 + $0x780] sm:$0xff]
    %v1521 = vld [vmem:[#allocation8 + $0x788] sm:$0xff]
    %v1522 = vld [vmem:[#allocation8 + $0x790] sm:$0xff]
    %v1523 = vld [vmem:[#allocation8 + $0x798] sm:$0xff]
    %v1524 = vld [vmem:[#allocation8 + $0x7a0] sm:$0xff]
    %v1525 = vld [vmem:[#allocation8 + $0x7a8] sm:$0xff]
    %v1526 = vld [vmem:[#allocation8 + $0x7b0] sm:$0xff]
    %v1527 = vld [vmem:[#allocation8 + $0x7b8] sm:$0xff]
    %v1528 = vld [vmem:[#allocation8 + $0x7c0] sm:$0xff]
    %v1529 = vld [vmem:[#allocation8 + $0x7c8] sm:$0xff]
    %v1530 = vld [vmem:[#allocation8 + $0x7d0] sm:$0xff]
    %v1531 = vld [vmem:[#allocation8 + $0x7d8] sm:$0xff]
    %v1532 = vld [vmem:[#allocation8 + $0x7e0] sm:$0xff]
    %v1533 = vld [vmem:[#allocation8 + $0x7e8] sm:$0xff]
    %v1534 = vld [vmem:[#allocation8 + $0x7f0] sm:$0xff]
    %v1535 = vld [vmem:[#allocation8 + $0x7f8] sm:$0xff]
    %v1540 = vcombine.high %v1276, %v1276
    %v1542 = vunpack.c.l.s4 1983009808
    %v1543 = vunpack.c.0.s8 %v1542
    %v1544 = vlaneseq
    %v1545 = vshrl.u32 %v1544, 7
    %v1546 = vsub.s32 %v1543, %v1545
    %v1547 = vrot.slane %v1276, %v1546
    %v1549 = vunpack.c.l.s4 1983009808
    %v1550 = vunpack.c.0.s8 %v1549
    %v1551 = vlaneseq
    %v1552 = vshrl.u32 %v1551, 7
    %v1553 = vsub.s32 %v1550, %v1552
    %v1554 = vrot.slane %v1540, %v1553
    %v1555 = vcombine.high %v1547, %v1547
    %v1556 = vcombine.high %v1554, %v1554
    %v1557 = vcombine.high %v1277, %v1277
    %v1559 = vunpack.c.l.s4 1983009808
    %v1560 = vunpack.c.0.s8 %v1559
    %v1561 = vlaneseq
    %v1562 = vshrl.u32 %v1561, 7
    %v1563 = vsub.s32 %v1560, %v1562
    %v1564 = vrot.slane %v1277, %v1563
    %v1566 = vunpack.c.l.s4 1983009808
    %v1567 = vunpack.c.0.s8 %v1566
    %v1568 = vlaneseq
    %v1569 = vshrl.u32 %v1568, 7
    %v1570 = vsub.s32 %v1567, %v1569
    %v1571 = vrot.slane %v1557, %v1570
    %v1572 = vcombine.high %v1564, %v1564
    %v1573 = vcombine.high %v1571, %v1571
    %v1574 = vcombine.high %v1278, %v1278
    %v1576 = vunpack.c.l.s4 1983009808
    %v1577 = vunpack.c.0.s8 %v1576
    %v1578 = vlaneseq
    %v1579 = vshrl.u32 %v1578, 7
    %v1580 = vsub.s32 %v1577, %v1579
    %v1581 = vrot.slane %v1278, %v1580
    %v1583 = vunpack.c.l.s4 1983009808
    %v1584 = vunpack.c.0.s8 %v1583
    %v1585 = vlaneseq
    %v1586 = vshrl.u32 %v1585, 7
    %v1587 = vsub.s32 %v1584, %v1586
    %v1588 = vrot.slane %v1574, %v1587
    %v1589 = vcombine.high %v1581, %v1581
    %v1590 = vcombine.high %v1588, %v1588
    %v1591 = vcombine.high %v1279, %v1279
    %v1593 = vunpack.c.l.s4 1983009808
    %v1594 = vunpack.c.0.s8 %v1593
    %v1595 = vlaneseq
    %v1596 = vshrl.u32 %v1595, 7
    %v1597 = vsub.s32 %v1594, %v1596
    %v1598 = vrot.slane %v1279, %v1597
    %v1600 = vunpack.c.l.s4 1983009808
    %v1601 = vunpack.c.0.s8 %v1600
    %v1602 = vlaneseq
    %v1603 = vshrl.u32 %v1602, 7
    %v1604 = vsub.s32 %v1601, %v1603
    %v1605 = vrot.slane %v1591, %v1604
    %v1606 = vcombine.high %v1598, %v1598
    %v1607 = vcombine.high %v1605, %v1605
    %1624 = vmatprep.subr.mxu0 0.0
    %1625 = vmatpush1.msra.mxu0 %v1280
    %1626 = vmatprep.subr.mxu0 0.0
    %1627 = vmatpush1.msra.mxu0 %v1281
    %1628 = vmatprep.subr.mxu0 0.0
    %1629 = vmatpush1.msra.mxu0 %v1282
    %1630 = vmatprep.subr.mxu0 0.0
    %1631 = vmatpush1.msra.mxu0 %v1283
    %1632 = vmatprep.subr.mxu0 0.0
    %1633 = vmatpush1.msra.mxu0 %v1284
    %1634 = vmatprep.subr.mxu0 0.0
    %1635 = vmatpush1.msra.mxu0 %v1285
    %1636 = vmatprep.subr.mxu0 0.0
    %1637 = vmatpush1.msra.mxu0 %v1286
    %1638 = vmatprep.subr.mxu0 0.0
    %1639 = vmatpush1.msra.mxu0 %v1287
    %1640 = vmatprep.subr.mxu0 0.0
    %1641 = vmatpush1.msra.mxu0 %v1288
    %1642 = vmatprep.subr.mxu0 0.0
    %1643 = vmatpush1.msra.mxu0 %v1289
    %1644 = vmatprep.subr.mxu0 0.0
    %1645 = vmatpush1.msra.mxu0 %v1290
    %1646 = vmatprep.subr.mxu0 0.0
    %1647 = vmatpush1.msra.mxu0 %v1291
    %1648 = vmatprep.subr.mxu0 0.0
    %1649 = vmatpush1.msra.mxu0 %v1292
    %1650 = vmatprep.subr.mxu0 0.0
    %1651 = vmatpush1.msra.mxu0 %v1293
    %1652 = vmatprep.subr.mxu0 0.0
    %1653 = vmatpush1.msra.mxu0 %v1294
    %1654 = vmatprep.subr.mxu0 0.0
    %1655 = vmatpush1.msra.mxu0 %v1295
    %1656 = vmatprep.subr.mxu0 0.0
    %1657 = vmatpush1.msra.mxu0 %v1296
    %1658 = vmatprep.subr.mxu0 0.0
    %1659 = vmatpush1.msra.mxu0 %v1297
    %1660 = vmatprep.subr.mxu0 0.0
    %1661 = vmatpush1.msra.mxu0 %v1298
    %1662 = vmatprep.subr.mxu0 0.0
    %1663 = vmatpush1.msra.mxu0 %v1299
    %1664 = vmatprep.subr.mxu0 0.0
    %1665 = vmatpush1.msra.mxu0 %v1300
    %1666 = vmatprep.subr.mxu0 0.0
    %1667 = vmatpush1.msra.mxu0 %v1301
    %1668 = vmatprep.subr.mxu0 0.0
    %1669 = vmatpush1.msra.mxu0 %v1302
    %1670 = vmatprep.subr.mxu0 0.0
    %1671 = vmatpush1.msra.mxu0 %v1303
    %1672 = vmatprep.subr.mxu0 0.0
    %1673 = vmatpush1.msra.mxu0 %v1304
    %1674 = vmatprep.subr.mxu0 0.0
    %1675 = vmatpush1.msra.mxu0 %v1305
    %1676 = vmatprep.subr.mxu0 0.0
    %1677 = vmatpush1.msra.mxu0 %v1306
    %1678 = vmatprep.subr.mxu0 0.0
    %1679 = vmatpush1.msra.mxu0 %v1307
    %1680 = vmatprep.subr.mxu0 0.0
    %1681 = vmatpush1.msra.mxu0 %v1308
    %1682 = vmatprep.subr.mxu0 0.0
    %1683 = vmatpush1.msra.mxu0 %v1309
    %1684 = vmatprep.subr.mxu0 0.0
    %1685 = vmatpush1.msra.mxu0 %v1310
    %1686 = vmatprep.subr.mxu0 0.0
    %1687 = vmatpush1.msra.mxu0 %v1311
    %1688 = vmatprep.mubr.f32.mxu0 %v1555
    %1689 = vmatmul.mubr.f32.gmra.mrb[0].mxu0 %v1547
    %v1690 = vpop.f32.mrb[0].mxu0
    %v1691 = vadd.f32 0.0, %v1690
    %v1692 = vpop.f32.mrb[0].mxu0
    %1693 = vdwg.mxu0
    %1694 = vmatprep.subr.mxu0 0.0
    %1695 = vmatpush1.msra.mxu0 %v1312
    %1696 = vmatprep.subr.mxu0 0.0
    %1697 = vmatpush1.msra.mxu0 %v1313
    %1698 = vmatprep.subr.mxu0 0.0
    %1699 = vmatpush1.msra.mxu0 %v1314
    %1700 = vmatprep.subr.mxu0 0.0
    %1701 = vmatpush1.msra.mxu0 %v1315
    %1702 = vmatprep.subr.mxu0 0.0
    %1703 = vmatpush1.msra.mxu0 %v1316
    %1704 = vmatprep.subr.mxu0 0.0
    %1705 = vmatpush1.msra.mxu0 %v1317
    %1706 = vmatprep.subr.mxu0 0.0
    %1707 = vmatpush1.msra.mxu0 %v1318
    %1708 = vmatprep.subr.mxu0 0.0
    %1709 = vmatpush1.msra.mxu0 %v1319
    %1710 = vmatprep.subr.mxu0 0.0
    %1711 = vmatpush1.msra.mxu0 %v1320
    %1712 = vmatprep.subr.mxu0 0.0
    %1713 = vmatpush1.msra.mxu0 %v1321
    %1714 = vmatprep.subr.mxu0 0.0
    %1715 = vmatpush1.msra.mxu0 %v1322
    %1716 = vmatprep.subr.mxu0 0.0
    %1717 = vmatpush1.msra.mxu0 %v1323
    %1718 = vmatprep.subr.mxu0 0.0
    %1719 = vmatpush1.msra.mxu0 %v1324
    %1720 = vmatprep.subr.mxu0 0.0
    %1721 = vmatpush1.msra.mxu0 %v1325
    %1722 = vmatprep.subr.mxu0 0.0
    %1723 = vmatpush1.msra.mxu0 %v1326
    %1724 = vmatprep.subr.mxu0 0.0
    %1725 = vmatpush1.msra.mxu0 %v1327
    %1726 = vmatprep.subr.mxu0 0.0
    %1727 = vmatpush1.msra.mxu0 %v1328
    %1728 = vmatprep.subr.mxu0 0.0
    %1729 = vmatpush1.msra.mxu0 %v1329
    %1730 = vmatprep.subr.mxu0 0.0
    %1731 = vmatpush1.msra.mxu0 %v1330
    %1732 = vmatprep.subr.mxu0 0.0
    %1733 = vmatpush1.msra.mxu0 %v1331
    %1734 = vmatprep.subr.mxu0 0.0
    %1735 = vmatpush1.msra.mxu0 %v1332
    %1736 = vmatprep.subr.mxu0 0.0
    %1737 = vmatpush1.msra.mxu0 %v1333
    %1738 = vmatprep.subr.mxu0 0.0
    %1739 = vmatpush1.msra.mxu0 %v1334
    %1740 = vmatprep.subr.mxu0 0.0
    %1741 = vmatpush1.msra.mxu0 %v1335
    %1742 = vmatprep.subr.mxu0 0.0
    %1743 = vmatpush1.msra.mxu0 %v1336
    %1744 = vmatprep.subr.mxu0 0.0
    %1745 = vmatpush1.msra.mxu0 %v1337
    %1746 = vmatprep.subr.mxu0 0.0
    %1747 = vmatpush1.msra.mxu0 %v1338
    %1748 = vmatprep.subr.mxu0 0.0
    %1749 = vmatpush1.msra.mxu0 %v1339
    %1750 = vmatprep.subr.mxu0 0.0
    %1751 = vmatpush1.msra.mxu0 %v1340
    %1752 = vmatprep.subr.mxu0 0.0
    %1753 = vmatpush1.msra.mxu0 %v1341
    %1754 = vmatprep.subr.mxu0 0.0
    %1755 = vmatpush1.msra.mxu0 %v1342
    %1756 = vmatprep.subr.mxu0 0.0
    %1757 = vmatpush1.msra.mxu0 %v1343
    %1758 = vmatprep.mubr.f32.mxu0 %v1556
    %1759 = vmatmul.mubr.f32.gmra.mrb[0].mxu0 %v1554
    %v1760 = vpop.f32.mrb[0].mxu0
    %v1761 = vadd.f32 %v1691, %v1760
    %v1762 = vpop.f32.mrb[0].mxu0
    %1763 = vdwg.mxu0
    %1764 = vmatprep.subr.mxu0 0.0
    %1765 = vmatpush1.msra.mxu0 %v1344
    %1766 = vmatprep.subr.mxu0 0.0
    %1767 = vmatpush1.msra.mxu0 %v1345
    %1768 = vmatprep.subr.mxu0 0.0
    %1769 = vmatpush1.msra.mxu0 %v1346
    %1770 = vmatprep.subr.mxu0 0.0
    %1771 = vmatpush1.msra.mxu0 %v1347
    %1772 = vmatprep.subr.mxu0 0.0
    %1773 = vmatpush1.msra.mxu0 %v1348
    %1774 = vmatprep.subr.mxu0 0.0
    %1775 = vmatpush1.msra.mxu0 %v1349
    %1776 = vmatprep.subr.mxu0 0.0
    %1777 = vmatpush1.msra.mxu0 %v1350
    %1778 = vmatprep.subr.mxu0 0.0
    %1779 = vmatpush1.msra.mxu0 %v1351
    %1780 = vmatprep.subr.mxu0 0.0
    %1781 = vmatpush1.msra.mxu0 %v1352
    %1782 = vmatprep.subr.mxu0 0.0
    %1783 = vmatpush1.msra.mxu0 %v1353
    %1784 = vmatprep.subr.mxu0 0.0
    %1785 = vmatpush1.msra.mxu0 %v1354
    %1786 = vmatprep.subr.mxu0 0.0
    %1787 = vmatpush1.msra.mxu0 %v1355
    %1788 = vmatprep.subr.mxu0 0.0
    %1789 = vmatpush1.msra.mxu0 %v1356
    %1790 = vmatprep.subr.mxu0 0.0
    %1791 = vmatpush1.msra.mxu0 %v1357
    %1792 = vmatprep.subr.mxu0 0.0
    %1793 = vmatpush1.msra.mxu0 %v1358
    %1794 = vmatprep.subr.mxu0 0.0
    %1795 = vmatpush1.msra.mxu0 %v1359
    %1796 = vmatprep.subr.mxu0 0.0
    %1797 = vmatpush1.msra.mxu0 %v1360
    %1798 = vmatprep.subr.mxu0 0.0
    %1799 = vmatpush1.msra.mxu0 %v1361
    %1800 = vmatprep.subr.mxu0 0.0
    %1801 = vmatpush1.msra.mxu0 %v1362
    %1802 = vmatprep.subr.mxu0 0.0
    %1803 = vmatpush1.msra.mxu0 %v1363
    %1804 = vmatprep.subr.mxu0 0.0
    %1805 = vmatpush1.msra.mxu0 %v1364
    %1806 = vmatprep.subr.mxu0 0.0
    %1807 = vmatpush1.msra.mxu0 %v1365
    %1808 = vmatprep.subr.mxu0 0.0
    %1809 = vmatpush1.msra.mxu0 %v1366
    %1810 = vmatprep.subr.mxu0 0.0
    %1811 = vmatpush1.msra.mxu0 %v1367
    %1812 = vmatprep.subr.mxu0 0.0
    %1813 = vmatpush1.msra.mxu0 %v1368
    %1814 = vmatprep.subr.mxu0 0.0
    %1815 = vmatpush1.msra.mxu0 %v1369
    %1816 = vmatprep.subr.mxu0 0.0
    %1817 = vmatpush1.msra.mxu0 %v1370
    %1818 = vmatprep.subr.mxu0 0.0
    %1819 = vmatpush1.msra.mxu0 %v1371
    %1820 = vmatprep.subr.mxu0 0.0
    %1821 = vmatpush1.msra.mxu0 %v1372
    %1822 = vmatprep.subr.mxu0 0.0
    %1823 = vmatpush1.msra.mxu0 %v1373
    %1824 = vmatprep.subr.mxu0 0.0
    %1825 = vmatpush1.msra.mxu0 %v1374
    %1826 = vmatprep.subr.mxu0 0.0
    %1827 = vmatpush1.msra.mxu0 %v1375
    %1828 = vmatprep.mubr.f32.mxu0 %v1572
    %1829 = vmatmul.mubr.f32.gmra.mrb[0].mxu0 %v1564
    %v1830 = vpop.f32.mrb[0].mxu0
    %v1831 = vadd.f32 %v1761, %v1830
    %v1832 = vpop.f32.mrb[0].mxu0
    %1833 = vdwg.mxu0
    %1834 = vmatprep.subr.mxu0 0.0
    %1835 = vmatpush1.msra.mxu0 %v1376
    %1836 = vmatprep.subr.mxu0 0.0
    %1837 = vmatpush1.msra.mxu0 %v1377
    %1838 = vmatprep.subr.mxu0 0.0
    %1839 = vmatpush1.msra.mxu0 %v1378
    %1840 = vmatprep.subr.mxu0 0.0
    %1841 = vmatpush1.msra.mxu0 %v1379
    %1842 = vmatprep.subr.mxu0 0.0
    %1843 = vmatpush1.msra.mxu0 %v1380
    %1844 = vmatprep.subr.mxu0 0.0
    %1845 = vmatpush1.msra.mxu0 %v1381
    %1846 = vmatprep.subr.mxu0 0.0
    %1847 = vmatpush1.msra.mxu0 %v1382
    %1848 = vmatprep.subr.mxu0 0.0
    %1849 = vmatpush1.msra.mxu0 %v1383
    %1850 = vmatprep.subr.mxu0 0.0
    %1851 = vmatpush1.msra.mxu0 %v1384
    %1852 = vmatprep.subr.mxu0 0.0
    %1853 = vmatpush1.msra.mxu0 %v1385
    %1854 = vmatprep.subr.mxu0 0.0
    %1855 = vmatpush1.msra.mxu0 %v1386
    %1856 = vmatprep.subr.mxu0 0.0
    %1857 = vmatpush1.msra.mxu0 %v1387
    %1858 = vmatprep.subr.mxu0 0.0
    %1859 = vmatpush1.msra.mxu0 %v1388
    %1860 = vmatprep.subr.mxu0 0.0
    %1861 = vmatpush1.msra.mxu0 %v1389
    %1862 = vmatprep.subr.mxu0 0.0
    %1863 = vmatpush1.msra.mxu0 %v1390
    %1864 = vmatprep.subr.mxu0 0.0
    %1865 = vmatpush1.msra.mxu0 %v1391
    %1866 = vmatprep.subr.mxu0 0.0
    %1867 = vmatpush1.msra.mxu0 %v1392
    %1868 = vmatprep.subr.mxu0 0.0
    %1869 = vmatpush1.msra.mxu0 %v1393
    %1870 = vmatprep.subr.mxu0 0.0
    %1871 = vmatpush1.msra.mxu0 %v1394
    %1872 = vmatprep.subr.mxu0 0.0
    %1873 = vmatpush1.msra.mxu0 %v1395
    %1874 = vmatprep.subr.mxu0 0.0
    %1875 = vmatpush1.msra.mxu0 %v1396
    %1876 = vmatprep.subr.mxu0 0.0
    %1877 = vmatpush1.msra.mxu0 %v1397
    %1878 = vmatprep.subr.mxu0 0.0
    %1879 = vmatpush1.msra.mxu0 %v1398
    %1880 = vmatprep.subr.mxu0 0.0
    %1881 = vmatpush1.msra.mxu0 %v1399
    %1882 = vmatprep.subr.mxu0 0.0
    %1883 = vmatpush1.msra.mxu0 %v1400
    %1884 = vmatprep.subr.mxu0 0.0
    %1885 = vmatpush1.msra.mxu0 %v1401
    %1886 = vmatprep.subr.mxu0 0.0
    %1887 = vmatpush1.msra.mxu0 %v1402
    %1888 = vmatprep.subr.mxu0 0.0
    %1889 = vmatpush1.msra.mxu0 %v1403
    %1890 = vmatprep.subr.mxu0 0.0
    %1891 = vmatpush1.msra.mxu0 %v1404
    %1892 = vmatprep.subr.mxu0 0.0
    %1893 = vmatpush1.msra.mxu0 %v1405
    %1894 = vmatprep.subr.mxu0 0.0
    %1895 = vmatpush1.msra.mxu0 %v1406
    %1896 = vmatprep.subr.mxu0 0.0
    %1897 = vmatpush1.msra.mxu0 %v1407
    %1898 = vmatprep.mubr.f32.mxu0 %v1573
    %1899 = vmatmul.mubr.f32.gmra.mrb[0].mxu0 %v1571
    %v1900 = vpop.f32.mrb[0].mxu0
    %v1901 = vadd.f32 %v1831, %v1900
    %v1902 = vpop.f32.mrb[0].mxu0
    %1903 = vdwg.mxu0
    %1904 = vmatprep.subr.mxu0 0.0
    %1905 = vmatpush1.msra.mxu0 %v1408
    %1906 = vmatprep.subr.mxu0 0.0
    %1907 = vmatpush1.msra.mxu0 %v1409
    %1908 = vmatprep.subr.mxu0 0.0
    %1909 = vmatpush1.msra.mxu0 %v1410
    %1910 = vmatprep.subr.mxu0 0.0
    %1911 = vmatpush1.msra.mxu0 %v1411
    %1912 = vmatprep.subr.mxu0 0.0
    %1913 = vmatpush1.msra.mxu0 %v1412
    %1914 = vmatprep.subr.mxu0 0.0
    %1915 = vmatpush1.msra.mxu0 %v1413
    %1916 = vmatprep.subr.mxu0 0.0
    %1917 = vmatpush1.msra.mxu0 %v1414
    %1918 = vmatprep.subr.mxu0 0.0
    %1919 = vmatpush1.msra.mxu0 %v1415
    %1920 = vmatprep.subr.mxu0 0.0
    %1921 = vmatpush1.msra.mxu0 %v1416
    %1922 = vmatprep.subr.mxu0 0.0
    %1923 = vmatpush1.msra.mxu0 %v1417
    %1924 = vmatprep.subr.mxu0 0.0
    %1925 = vmatpush1.msra.mxu0 %v1418
    %1926 = vmatprep.subr.mxu0 0.0
    %1927 = vmatpush1.msra.mxu0 %v1419
    %1928 = vmatprep.subr.mxu0 0.0
    %1929 = vmatpush1.msra.mxu0 %v1420
    %1930 = vmatprep.subr.mxu0 0.0
    %1931 = vmatpush1.msra.mxu0 %v1421
    %1932 = vmatprep.subr.mxu0 0.0
    %1933 = vmatpush1.msra.mxu0 %v1422
    %1934 = vmatprep.subr.mxu0 0.0
    %1935 = vmatpush1.msra.mxu0 %v1423
    %1936 = vmatprep.subr.mxu0 0.0
    %1937 = vmatpush1.msra.mxu0 %v1424
    %1938 = vmatprep.subr.mxu0 0.0
    %1939 = vmatpush1.msra.mxu0 %v1425
    %1940 = vmatprep.subr.mxu0 0.0
    %1941 = vmatpush1.msra.mxu0 %v1426
    %1942 = vmatprep.subr.mxu0 0.0
    %1943 = vmatpush1.msra.mxu0 %v1427
    %1944 = vmatprep.subr.mxu0 0.0
    %1945 = vmatpush1.msra.mxu0 %v1428
    %1946 = vmatprep.subr.mxu0 0.0
    %1947 = vmatpush1.msra.mxu0 %v1429
    %1948 = vmatprep.subr.mxu0 0.0
    %1949 = vmatpush1.msra.mxu0 %v1430
    %1950 = vmatprep.subr.mxu0 0.0
    %1951 = vmatpush1.msra.mxu0 %v1431
    %1952 = vmatprep.subr.mxu0 0.0
    %1953 = vmatpush1.msra.mxu0 %v1432
    %1954 = vmatprep.subr.mxu0 0.0
    %1955 = vmatpush1.msra.mxu0 %v1433
    %1956 = vmatprep.subr.mxu0 0.0
    %1957 = vmatpush1.msra.mxu0 %v1434
    %1958 = vmatprep.subr.mxu0 0.0
    %1959 = vmatpush1.msra.mxu0 %v1435
    %1960 = vmatprep.subr.mxu0 0.0
    %1961 = vmatpush1.msra.mxu0 %v1436
    %1962 = vmatprep.subr.mxu0 0.0
    %1963 = vmatpush1.msra.mxu0 %v1437
    %1964 = vmatprep.subr.mxu0 0.0
    %1965 = vmatpush1.msra.mxu0 %v1438
    %1966 = vmatprep.subr.mxu0 0.0
    %1967 = vmatpush1.msra.mxu0 %v1439
    %1968 = vmatprep.mubr.f32.mxu0 %v1589
    %1969 = vmatmul.mubr.f32.gmra.mrb[0].mxu0 %v1581
    %v1970 = vpop.f32.mrb[0].mxu0
    %v1971 = vadd.f32 %v1901, %v1970
    %v1972 = vpop.f32.mrb[0].mxu0
    %1973 = vdwg.mxu0
    %1974 = vmatprep.subr.mxu0 0.0
    %1975 = vmatpush1.msra.mxu0 %v1440
    %1976 = vmatprep.subr.mxu0 0.0
    %1977 = vmatpush1.msra.mxu0 %v1441
    %1978 = vmatprep.subr.mxu0 0.0
    %1979 = vmatpush1.msra.mxu0 %v1442
    %1980 = vmatprep.subr.mxu0 0.0
    %1981 = vmatpush1.msra.mxu0 %v1443
    %1982 = vmatprep.subr.mxu0 0.0
    %1983 = vmatpush1.msra.mxu0 %v1444
    %1984 = vmatprep.subr.mxu0 0.0
    %1985 = vmatpush1.msra.mxu0 %v1445
    %1986 = vmatprep.subr.mxu0 0.0
    %1987 = vmatpush1.msra.mxu0 %v1446
    %1988 = vmatprep.subr.mxu0 0.0
    %1989 = vmatpush1.msra.mxu0 %v1447
    %1990 = vmatprep.subr.mxu0 0.0
    %1991 = vmatpush1.msra.mxu0 %v1448
    %1992 = vmatprep.subr.mxu0 0.0
    %1993 = vmatpush1.msra.mxu0 %v1449
    %1994 = vmatprep.subr.mxu0 0.0
    %1995 = vmatpush1.msra.mxu0 %v1450
    %1996 = vmatprep.subr.mxu0 0.0
    %1997 = vmatpush1.msra.mxu0 %v1451
    %1998 = vmatprep.subr.mxu0 0.0
    %1999 = vmatpush1.msra.mxu0 %v1452
    %2000 = vmatprep.subr.mxu0 0.0
    %2001 = vmatpush1.msra.mxu0 %v1453
    %2002 = vmatprep.subr.mxu0 0.0
    %2003 = vmatpush1.msra.mxu0 %v1454
    %2004 = vmatprep.subr.mxu0 0.0
    %2005 = vmatpush1.msra.mxu0 %v1455
    %2006 = vmatprep.subr.mxu0 0.0
    %2007 = vmatpush1.msra.mxu0 %v1456
    %2008 = vmatprep.subr.mxu0 0.0
    %2009 = vmatpush1.msra.mxu0 %v1457
    %2010 = vmatprep.subr.mxu0 0.0
    %2011 = vmatpush1.msra.mxu0 %v1458
    %2012 = vmatprep.subr.mxu0 0.0
    %2013 = vmatpush1.msra.mxu0 %v1459
    %2014 = vmatprep.subr.mxu0 0.0
    %2015 = vmatpush1.msra.mxu0 %v1460
    %2016 = vmatprep.subr.mxu0 0.0
    %2017 = vmatpush1.msra.mxu0 %v1461
    %2018 = vmatprep.subr.mxu0 0.0
    %2019 = vmatpush1.msra.mxu0 %v1462
    %2020 = vmatprep.subr.mxu0 0.0
    %2021 = vmatpush1.msra.mxu0 %v1463
    %2022 = vmatprep.subr.mxu0 0.0
    %2023 = vmatpush1.msra.mxu0 %v1464
    %2024 = vmatprep.subr.mxu0 0.0
    %2025 = vmatpush1.msra.mxu0 %v1465
    %2026 = vmatprep.subr.mxu0 0.0
    %2027 = vmatpush1.msra.mxu0 %v1466
    %2028 = vmatprep.subr.mxu0 0.0
    %2029 = vmatpush1.msra.mxu0 %v1467
    %2030 = vmatprep.subr.mxu0 0.0
    %2031 = vmatpush1.msra.mxu0 %v1468
    %2032 = vmatprep.subr.mxu0 0.0
    %2033 = vmatpush1.msra.mxu0 %v1469
    %2034 = vmatprep.subr.mxu0 0.0
    %2035 = vmatpush1.msra.mxu0 %v1470
    %2036 = vmatprep.subr.mxu0 0.0
    %2037 = vmatpush1.msra.mxu0 %v1471
    %2038 = vmatprep.mubr.f32.mxu0 %v1590
    %2039 = vmatmul.mubr.f32.gmra.mrb[0].mxu0 %v1588
    %v2040 = vpop.f32.mrb[0].mxu0
    %v2041 = vadd.f32 %v1971, %v2040
    %v2042 = vpop.f32.mrb[0].mxu0
    %2043 = vdwg.mxu0
    %2044 = vmatprep.subr.mxu0 0.0
    %2045 = vmatpush1.msra.mxu0 %v1472
    %2046 = vmatprep.subr.mxu0 0.0
    %2047 = vmatpush1.msra.mxu0 %v1473
    %2048 = vmatprep.subr.mxu0 0.0
    %2049 = vmatpush1.msra.mxu0 %v1474
    %2050 = vmatprep.subr.mxu0 0.0
    %2051 = vmatpush1.msra.mxu0 %v1475
    %2052 = vmatprep.subr.mxu0 0.0
    %2053 = vmatpush1.msra.mxu0 %v1476
    %2054 = vmatprep.subr.mxu0 0.0
    %2055 = vmatpush1.msra.mxu0 %v1477
    %2056 = vmatprep.subr.mxu0 0.0
    %2057 = vmatpush1.msra.mxu0 %v1478
    %2058 = vmatprep.subr.mxu0 0.0
    %2059 = vmatpush1.msra.mxu0 %v1479
    %2060 = vmatprep.subr.mxu0 0.0
    %2061 = vmatpush1.msra.mxu0 %v1480
    %2062 = vmatprep.subr.mxu0 0.0
    %2063 = vmatpush1.msra.mxu0 %v1481
    %2064 = vmatprep.subr.mxu0 0.0
    %2065 = vmatpush1.msra.mxu0 %v1482
    %2066 = vmatprep.subr.mxu0 0.0
    %2067 = vmatpush1.msra.mxu0 %v1483
    %2068 = vmatprep.subr.mxu0 0.0
    %2069 = vmatpush1.msra.mxu0 %v1484
    %2070 = vmatprep.subr.mxu0 0.0
    %2071 = vmatpush1.msra.mxu0 %v1485
    %2072 = vmatprep.subr.mxu0 0.0
    %2073 = vmatpush1.msra.mxu0 %v1486
    %2074 = vmatprep.subr.mxu0 0.0
    %2075 = vmatpush1.msra.mxu0 %v1487
    %2076 = vmatprep.subr.mxu0 0.0
    %2077 = vmatpush1.msra.mxu0 %v1488
    %2078 = vmatprep.subr.mxu0 0.0
    %2079 = vmatpush1.msra.mxu0 %v1489
    %2080 = vmatprep.subr.mxu0 0.0
    %2081 = vmatpush1.msra.mxu0 %v1490
    %2082 = vmatprep.subr.mxu0 0.0
    %2083 = vmatpush1.msra.mxu0 %v1491
    %2084 = vmatprep.subr.mxu0 0.0
    %2085 = vmatpush1.msra.mxu0 %v1492
    %2086 = vmatprep.subr.mxu0 0.0
    %2087 = vmatpush1.msra.mxu0 %v1493
    %2088 = vmatprep.subr.mxu0 0.0
    %2089 = vmatpush1.msra.mxu0 %v1494
    %2090 = vmatprep.subr.mxu0 0.0
    %2091 = vmatpush1.msra.mxu0 %v1495
    %2092 = vmatprep.subr.mxu0 0.0
    %2093 = vmatpush1.msra.mxu0 %v1496
    %2094 = vmatprep.subr.mxu0 0.0
    %2095 = vmatpush1.msra.mxu0 %v1497
    %2096 = vmatprep.subr.mxu0 0.0
    %2097 = vmatpush1.msra.mxu0 %v1498
    %2098 = vmatprep.subr.mxu0 0.0
    %2099 = vmatpush1.msra.mxu0 %v1499
    %2100 = vmatprep.subr.mxu0 0.0
    %2101 = vmatpush1.msra.mxu0 %v1500
    %2102 = vmatprep.subr.mxu0 0.0
    %2103 = vmatpush1.msra.mxu0 %v1501
    %2104 = vmatprep.subr.mxu0 0.0
    %2105 = vmatpush1.msra.mxu0 %v1502
    %2106 = vmatprep.subr.mxu0 0.0
    %2107 = vmatpush1.msra.mxu0 %v1503
    %2108 = vmatprep.mubr.f32.mxu0 %v1606
    %2109 = vmatmul.mubr.f32.gmra.mrb[0].mxu0 %v1598
    %v2110 = vpop.f32.mrb[0].mxu0
    %v2111 = vadd.f32 %v2041, %v2110
    %v2112 = vpop.f32.mrb[0].mxu0
    %2113 = vdwg.mxu0
    %2114 = vmatprep.subr.mxu0 0.0
    %2115 = vmatpush1.msra.mxu0 %v1504
    %2116 = vmatprep.subr.mxu0 0.0
    %2117 = vmatpush1.msra.mxu0 %v1505
    %2118 = vmatprep.subr.mxu0 0.0
    %2119 = vmatpush1.msra.mxu0 %v1506
    %2120 = vmatprep.subr.mxu0 0.0
    %2121 = vmatpush1.msra.mxu0 %v1507
    %2122 = vmatprep.subr.mxu0 0.0
    %2123 = vmatpush1.msra.mxu0 %v1508
    %2124 = vmatprep.subr.mxu0 0.0
    %2125 = vmatpush1.msra.mxu0 %v1509
    %2126 = vmatprep.subr.mxu0 0.0
    %2127 = vmatpush1.msra.mxu0 %v1510
    %2128 = vmatprep.subr.mxu0 0.0
    %2129 = vmatpush1.msra.mxu0 %v1511
    %2130 = vmatprep.subr.mxu0 0.0
    %2131 = vmatpush1.msra.mxu0 %v1512
    %2132 = vmatprep.subr.mxu0 0.0
    %2133 = vmatpush1.msra.mxu0 %v1513
    %2134 = vmatprep.subr.mxu0 0.0
    %2135 = vmatpush1.msra.mxu0 %v1514
    %2136 = vmatprep.subr.mxu0 0.0
    %2137 = vmatpush1.msra.mxu0 %v1515
    %2138 = vmatprep.subr.mxu0 0.0
    %2139 = vmatpush1.msra.mxu0 %v1516
    %2140 = vmatprep.subr.mxu0 0.0
    %2141 = vmatpush1.msra.mxu0 %v1517
    %2142 = vmatprep.subr.mxu0 0.0
    %2143 = vmatpush1.msra.mxu0 %v1518
    %2144 = vmatprep.subr.mxu0 0.0
    %2145 = vmatpush1.msra.mxu0 %v1519
    %2146 = vmatprep.subr.mxu0 0.0
    %2147 = vmatpush1.msra.mxu0 %v1520
    %2148 = vmatprep.subr.mxu0 0.0
    %2149 = vmatpush1.msra.mxu0 %v1521
    %2150 = vmatprep.subr.mxu0 0.0
    %2151 = vmatpush1.msra.mxu0 %v1522
    %2152 = vmatprep.subr.mxu0 0.0
    %2153 = vmatpush1.msra.mxu0 %v1523
    %2154 = vmatprep.subr.mxu0 0.0
    %2155 = vmatpush1.msra.mxu0 %v1524
    %2156 = vmatprep.subr.mxu0 0.0
    %2157 = vmatpush1.msra.mxu0 %v1525
    %2158 = vmatprep.subr.mxu0 0.0
    %2159 = vmatpush1.msra.mxu0 %v1526
    %2160 = vmatprep.subr.mxu0 0.0
    %2161 = vmatpush1.msra.mxu0 %v1527
    %2162 = vmatprep.subr.mxu0 0.0
    %2163 = vmatpush1.msra.mxu0 %v1528
    %2164 = vmatprep.subr.mxu0 0.0
    %2165 = vmatpush1.msra.mxu0 %v1529
    %2166 = vmatprep.subr.mxu0 0.0
    %2167 = vmatpush1.msra.mxu0 %v1530
    %2168 = vmatprep.subr.mxu0 0.0
    %2169 = vmatpush1.msra.mxu0 %v1531
    %2170 = vmatprep.subr.mxu0 0.0
    %2171 = vmatpush1.msra.mxu0 %v1532
    %2172 = vmatprep.subr.mxu0 0.0
    %2173 = vmatpush1.msra.mxu0 %v1533
    %2174 = vmatprep.subr.mxu0 0.0
    %2175 = vmatpush1.msra.mxu0 %v1534
    %2176 = vmatprep.subr.mxu0 0.0
    %2177 = vmatpush1.msra.mxu0 %v1535
    %2178 = vmatprep.mubr.f32.mxu0 %v1607
    %2179 = vmatmul.mubr.f32.gmra.mrb[0].mxu0 %v1605
    %v2180 = vpop.f32.mrb[0].mxu0
    %v2181 = vadd.f32 %v2111, %v2180
    %v2182 = vpop.f32.mrb[0].mxu0
    %2183 = vdwg.mxu0
    %vm2184 = vcmask 517120
    %2185 = vst.msk [vmem:[#allocation9] sm:$0x3] %vm2184, %v2181
    // Predicated region
    $region26: #{cnn_forward.1} parent=1 // pred_check
      _
    $region27: #{cnn_forward.1} parent=1 // pred_check_branch
      %2187 = sbr.rel (0) target = $region29
    $region28: #{cnn_forward.1} parent=1 // pred_region
      %s2189 = ssub.s32 32, 32
      %2190 = vsyncadd [#allocation5], %s2189
      %s2192 = sshll.u32 [#allocation9], 4
      %s2193 = int_to_ptr.vmem [resolvable:$true] %s2192
      %2195 = dma.vmem_to_hbm [thread:$0]  %s2193, 32, %s3, [#allocation5]
    $region29: #{cnn_forward.1} parent=1 // pred_fallthru
      _
    // Predicated region
    $region30: #{cnn_forward.1} parent=1 // pred_check
      _
    $region31: #{cnn_forward.1} parent=1 // pred_check_branch
      %2197 = sbr.rel (0) target = $region33
    $region32: #{cnn_forward.1} parent=1 // pred_region
      %2198 = dma.done [#allocation5], 32
    $region33: #{cnn_forward.1} parent=1 // pred_fallthru
      _
    %2199 = vsyncpa [#allocation4], 1
    %2200 = vsyncpa [#allocation7], 1
    %2201 = vsyncpa [#allocation5], 1

</llo_original>
